<compile_context>
chip_gen: v7x
topology: tpu7x:2x2x1
jax: 0.10.0
libtpu: 0.0.40
codegen_flags: <defaults>
</compile_context>

<pallas_src>
import math
from functools import partial

import numpy as np
import jax
import jax.numpy as jnp
from jax.experimental import pallas as pl
from jax.experimental.pallas import tpu as pltpu


def _linear_attention_kernel(x_ref, wqkv_ref, wout_ref, params_ref, blk_ref,
                             o_ref, q_scr, *, heads, dim_head, eps, n_valid, bt):
    """Bt batch elements per grid step.

    x_ref      : (Bt, C, N)      input pixels, bf16 (N lane-padded)
    wqkv_ref   : (3*hidden, C)   1x1 conv weight for q,k,v (no bias), bf16
    wout_ref   : (C, hidden)     1x1 conv weight of to_out[0], bf16
    params_ref : (C, 3)          [b_out, gamma, beta] packed, f32
    blk_ref    : (hidden,hidden) block-diagonal head mask * q-scale, f32
    o_ref      : (Bt, C, N)      output (f32 or bf16)
    q_scr      : (hidden, N)     VMEM scratch for the normalized q, bf16
    """
    f32 = jnp.float32
    bf16 = jnp.bfloat16
    hidden = heads * dim_head
    N = x_ref.shape[2]
    C = wout_ref.shape[0]

    # Shared operands: loaded once, reused for all Bt samples of this step.
    wqkv = wqkv_ref[...]                      # (3*hidden, C) bf16
    wout = wout_ref[...]                      # (C, hidden)   bf16
    b_out = params_ref[:, 0:1]                # (C, 1) f32
    gamma = params_ref[:, 1:2]
    beta = params_ref[:, 2:3]
    blk = blk_ref[...]                        # (hidden, hidden) f32 (scale folded)

    if n_valid != N:
        # single lane-row validity mask, broadcast everywhere it is needed
        col = jax.lax.broadcasted_iota(jnp.int32, (1, N), 1)
        mask = (col < n_valid).astype(f32)    # (1, N)

    inv_cnt = 1.0 / float(C * n_valid)

    for s in range(bt):
        x = x_ref[s]                                                   # (C, N) bf16

        # to_qkv: 1x1 conv == channel matmul (bf16 x bf16 -> f32 on the MXU)
        qkv = jnp.dot(wqkv, x, preferred_element_type=f32)             # (3*hidden, N)

        # ---- q: softmax over the per-head feature axis d ----------------
        for h in range(heads):
            lo = h * dim_head
            qh = qkv[lo:lo + dim_head, :]                              # (d, N) f32
            qh = jnp.exp(qh - jnp.max(qh, axis=0, keepdims=True))
            qh = qh * pl.reciprocal(jnp.sum(qh, axis=0, keepdims=True),
                                    approx=True)
            q_scr[lo:lo + dim_head, :] = qh.astype(bf16)
            # (the * scale of the reference is folded into blk)

        # ---- k: softmax over the sequence axis n -------------------------
        k = qkv[hidden:2 * hidden, :]                                  # (hidden, N)
        k = jnp.exp(k - jnp.max(k, axis=1, keepdims=True))
        if n_valid != N:
            k = k * mask          # padded columns must not contribute to sums
        k = k * pl.reciprocal(jnp.sum(k, axis=1, keepdims=True), approx=True)

        v = qkv[2 * hidden:, :]                                        # (hidden, N)

        # ---- packed attention (no explicit transpose) ---------------------
        # ctxT[e, d] = sum_n v[e, n] * k_softmax[d, n]  for ALL head pairs at
        # once; the per-head structure is recovered with the static
        # block-diagonal mask (q scale folded in) on the tiny (128,128) ctxT.
        ctxT = jax.lax.dot_general(
            v.astype(bf16), k.astype(bf16),
            dimension_numbers=(((1,), (1,)), ((), ())),
            preferred_element_type=f32)                                # (hidden, hidden)
        ctxT = (ctxT * blk).astype(bf16)

        # out[e, n] = sum_d ctxT[e, d] * q[d, n]  -> second full-width matmul
        out = jnp.dot(ctxT, q_scr[...], preferred_element_type=f32)    # (hidden, N)

        # ---- to_out[0]: 1x1 conv with bias --------------------------------
        y = jnp.dot(wout, out.astype(bf16), preferred_element_type=f32)  # (C, N)
        y = y + b_out

        # ---- to_out[1]: GroupNorm(1, C): single-pass sum / sum-of-squares -
        ym = y * mask if n_valid != N else y
        s1 = jnp.sum(ym, keepdims=True)                                # (1, 1)
        s2 = jnp.sum(ym * ym, keepdims=True)                           # (1, 1)
        mean = s1 * inv_cnt
        var = s2 * inv_cnt - mean * mean                               # biased variance
        y = (y - mean) * jax.lax.rsqrt(var + eps)
        o_ref[s] = (gamma * y + beta).astype(o_ref.dtype)


def _physical_vmem_bytes():
    """Best-effort physical VMEM per TensorCore; conservative 64 MiB fallback."""
    try:
        info = pltpu.get_tpu_info()
        for attr in ("vmem_capacity_bytes", "vmem_size_bytes", "vmem_bytes"):
            val = getattr(info, attr, None)
            if val:
                return int(val)
    except Exception:
        pass
    return 64 * 1024 * 1024


def _vmem_bytes_estimate(C, N_pad, hidden, bt, out_bytes):
    """Generous per-grid-step VMEM estimate (double-buffered blocks + temps)."""
    bf16, f32 = 2, 4
    est = 0
    est += 2 * bt * C * N_pad * bf16                    # x blocks (2x buffered)
    est += 2 * bt * C * N_pad * out_bytes               # output blocks
    est += 2 * ((3 * hidden * C + C * hidden) * bf16
                + C * 128 * f32 + hidden * hidden * f32)  # weights / params / blk
    est += 3 * hidden * N_pad * f32 * 2                 # qkv + elementwise temps
    est += 3 * hidden * N_pad * bf16                    # bf16 casts of q/k/v
    est += hidden * N_pad * bf16                        # q scratch
    est += 2 * hidden * hidden * f32                    # ctxT + scaled ctxT
    est += hidden * N_pad * f32 + 2 * C * N_pad * f32   # attention out + y temps
    return est


def _pick_bt(B, C, N_pad, hidden, out_bytes, phys_vmem):
    """Largest Bt that divides B, keeps the parallel grid >= 2 steps (when
    possible, for v7x's two TensorCores) and fits a VMEM budget."""
    for bt in (8, 4, 2, 1):
        if B % bt != 0:
            continue
        if bt > 1 and B // bt < 2:
            continue
        if _vmem_bytes_estimate(C, N_pad, hidden, bt, out_bytes) > 0.6 * phys_vmem:
            continue
        return bt
    return 1


def linear_attention(x, w_qkv, w_out, b_out, gamma, beta, *, heads, dim_head,
                     out_dtype=jnp.float32):
    """x: (B, C, H, W) float32, NCHW like the PyTorch module.

    out_dtype=jnp.bfloat16 halves output HBM traffic if downstream accepts it.
    """
    B, C, H, W = x.shape
    N = H * W
    hidden = heads * dim_head
    scale = dim_head ** (-0.5)

    # lane-pad flattened spatial dim to a multiple of 128 (unmasked vst / tiling)
    N_pad = max(128, ((N + 127) // 128) * 128)
    x_flat = x.reshape(B, C, N)
    if N_pad != N:
        x_flat = jnp.pad(x_flat, ((0, 0), (0, 0), (0, N_pad - N)))

    # bf16 MXU operands (f32 accumulation inside the kernel)
    x_bf = x_flat.astype(jnp.bfloat16)
    wqkv_bf = w_qkv.astype(jnp.bfloat16)
    wout_bf = w_out.astype(jnp.bfloat16)
    # pack bias / gamma / beta into one block -> one DMA instead of three
    params = jnp.stack([b_out, gamma, beta], axis=1).astype(jnp.float32)   # (C, 3)
    # block-diagonal per-head mask with the q scale folded in (trace-time const)
    blk = jnp.asarray(
        np.kron(np.eye(heads, dtype=np.float32),
                np.ones((dim_head, dim_head), dtype=np.float32)) * scale)  # (hid, hid)

    out_bytes = jnp.dtype(out_dtype).itemsize
    phys_vmem = _physical_vmem_bytes()
    bt = _pick_bt(B, C, N_pad, hidden, out_bytes, phys_vmem)
    grid_b = B // bt

    vmem_limit = int(max(2 * _vmem_bytes_estimate(C, N_pad, hidden, bt, out_bytes),
                         32 * 1024 * 1024))
    vmem_limit = int(min(vmem_limit, 0.85 * phys_vmem))   # headroom on v7x (64 MiB)

    # scheduler hint for XLA (this is a small custom call inside a larger graph)
    flops = int(2 * B * N * (3 * hidden * C + 2 * hidden * hidden + C * hidden))
    transcendentals = int(2 * B * N * hidden)
    bytes_accessed = int(B * C * N_pad * (2 + out_bytes)
                         + (3 * hidden * C + C * hidden) * 2
                         + C * 3 * 4 + hidden * hidden * 4)
    cost = pl.CostEstimate(flops=flops, transcendentals=transcendentals,
                           bytes_accessed=bytes_accessed)

    kern = partial(_linear_attention_kernel, heads=heads, dim_head=dim_head,
                   eps=1e-5, n_valid=N, bt=bt)

    out = pl.pallas_call(
        kern,
        out_shape=jax.ShapeDtypeStruct((B, C, N_pad), out_dtype),
        grid_spec=pltpu.PrefetchScalarGridSpec(
            num_scalar_prefetch=0,
            grid=(grid_b,),
            in_specs=[
                pl.BlockSpec((bt, C, N_pad), lambda b: (b, 0, 0)),
                pl.BlockSpec((3 * hidden, C), lambda b: (0, 0)),
                pl.BlockSpec((C, hidden), lambda b: (0, 0)),
                pl.BlockSpec((C, 3), lambda b: (0, 0)),
                pl.BlockSpec((hidden, hidden), lambda b: (0, 0)),
            ],
            out_specs=pl.BlockSpec((bt, C, N_pad), lambda b: (b, 0, 0)),
            scratch_shapes=[pltpu.VMEM((hidden, N_pad), jnp.bfloat16)],
        ),
        compiler_params=pltpu.CompilerParams(
            dimension_semantics=("parallel",),
            vmem_limit_bytes=vmem_limit),
        cost_estimate=cost,
    )(x_bf, wqkv_bf, wout_bf, params, blk)

    if N_pad != N:
        out = out[:, :, :N]
    return out.reshape(B, C, H, W)


def linear_attention_ref(x, w_qkv, w_out, b_out, gamma, beta, *, heads, dim_head):
    """Pure-JAX f32 reference matching the PyTorch forward exactly."""
    B, C, H, W = x.shape
    N = H * W
    hidden = heads * dim_head
    scale = dim_head ** (-0.5)

    xf = x.reshape(B, C, N)
    qkv = jnp.einsum('oc,bcn->bon', w_qkv, xf)
    q, k, v = jnp.split(qkv, 3, axis=1)
    q = q.reshape(B, heads, dim_head, N)
    k = k.reshape(B, heads, dim_head, N)
    v = v.reshape(B, heads, dim_head, N)

    q = jax.nn.softmax(q, axis=-2) * scale
    k = jax.nn.softmax(k, axis=-1)

    ctx = jnp.einsum('bhdn,bhen->bhde', k, v)
    out = jnp.einsum('bhde,bhdn->bhen', ctx, q)
    out = out.reshape(B, hidden, N)

    y = jnp.einsum('oc,bcn->bon', w_out, out) + b_out[None, :, None]
    mean = jnp.mean(y, axis=(1, 2), keepdims=True)
    var = jnp.var(y, axis=(1, 2), keepdims=True)
    y = (y - mean) / jnp.sqrt(var + 1e-5)
    y = gamma[None, :, None] * y + beta[None, :, None]
    return y.reshape(B, C, H, W)


if __name__ == "__main__":
    # Module hyperparameters (defaults of the PyTorch module).
    dim, heads, dim_head = 32, 4, 32
    hidden = heads * dim_head
    B, H, W = 2, 16, 16

    key = jax.random.PRNGKey(0)
    kx, k1, k2, k3, k4, k5, kx2, kx3 = jax.random.split(key, 8)

    # Deterministic synthetic parameters (shapes from __init__, squeezed 1x1 convs).
    x = jax.random.normal(kx, (B, dim, H, W), dtype=jnp.float32)
    w_qkv = jax.random.normal(k1, (3 * hidden, dim), jnp.float32) * (1.0 / math.sqrt(dim))
    w_out = jax.random.normal(k2, (dim, hidden), jnp.float32) * (1.0 / math.sqrt(hidden))
    b_out = jax.random.normal(k3, (dim,), jnp.float32) * 0.1
    gamma = 1.0 + 0.1 * jax.random.normal(k4, (dim,), jnp.float32)
    beta = 0.1 * jax.random.normal(k5, (dim,), jnp.float32)

    # Case 1: N = H*W multiple of 128 (no padding), B=2 -> Bt=1, grid of 2.
    out = linear_attention(x, w_qkv, w_out, b_out, gamma, beta,
                           heads=heads, dim_head=dim_head)
    out = jax.block_until_ready(out)
    ref = linear_attention_ref(x, w_qkv, w_out, b_out, gamma, beta,
                               heads=heads, dim_head=dim_head)
    assert out.shape == (B, dim, H, W)
    # bf16 MXU operands (f32 accumulation) -> looser tolerance vs f32 reference.
    assert jnp.allclose(out, ref, rtol=2e-2, atol=2e-2), \
        f"max abs err {jnp.max(jnp.abs(out - ref))}"

    # Case 2: N = 12*12 = 144 exercises the lane-padding / masked-statistics path.
    H2, W2 = 12, 12
    x2 = jax.random.normal(kx2, (B, dim, H2, W2), dtype=jnp.float32)
    out2 = jax.block_until_ready(
        linear_attention(x2, w_qkv, w_out, b_out, gamma, beta,
                         heads=heads, dim_head=dim_head))
    ref2 = linear_attention_ref(x2, w_qkv, w_out, b_out, gamma, beta,
                                heads=heads, dim_head=dim_head)
    assert out2.shape == (B, dim, H2, W2)
    assert jnp.allclose(out2, ref2, rtol=2e-2, atol=2e-2), \
        f"max abs err {jnp.max(jnp.abs(out2 - ref2))}"

    # Case 3: B=4 exercises the multi-sample-per-grid-step path (Bt=2, grid=2)
    # and the optional bf16 output.
    B3 = 4
    x3 = jax.random.normal(kx3, (B3, dim, H, W), dtype=jnp.float32)
    out3 = jax.block_until_ready(
        linear_attention(x3, w_qkv, w_out, b_out, gamma, beta,
                         heads=heads, dim_head=dim_head))
    ref3 = linear_attention_ref(x3, w_qkv, w_out, b_out, gamma, beta,
                                heads=heads, dim_head=dim_head)
    assert out3.shape == (B3, dim, H, W)
    assert jnp.allclose(out3, ref3, rtol=2e-2, atol=2e-2), \
        f"max abs err {jnp.max(jnp.abs(out3 - ref3))}"

    out3_bf = jax.block_until_ready(
        linear_attention(x3, w_qkv, w_out, b_out, gamma, beta,
                         heads=heads, dim_head=dim_head,
                         out_dtype=jnp.bfloat16))
    assert out3_bf.dtype == jnp.bfloat16
    assert jnp.allclose(out3_bf.astype(jnp.float32), ref3, rtol=5e-2, atol=5e-2), \
        f"max abs err {jnp.max(jnp.abs(out3_bf.astype(jnp.float32) - ref3))}"

    print("KERNEL_OK")
</pallas_src>

<mosaic_0001>
module attributes {stable_mosaic.version = 11 : i64} {
  func.func @_linear_attention_kernel(%arg0: i32, %arg1: memref<1x32x256xbf16, #tpu.memory_space<vmem>>, %arg2: memref<384x32xbf16, #tpu.memory_space<vmem>>, %arg3: memref<32x128xbf16, #tpu.memory_space<vmem>>, %arg4: memref<32x3xf32, #tpu.memory_space<vmem>>, %arg5: memref<128x128xf32, #tpu.memory_space<vmem>>, %arg6: memref<1x32x256xf32, #tpu.memory_space<vmem>>, %arg7: memref<128x256xbf16, #tpu.memory_space<vmem>>) attributes {dimension_semantics = [#tpu.dimension_semantics<parallel>], iteration_bounds = array<i64: 2>, scalar_prefetch = 0 : i64, scratch_operands = 1 : i64, tpu.core_type = #tpu.core_type<tc>, window_params = [{transform_indices = @transform_0, window_bounds = array<i64: 1, 32, 256>}, {pipeline_mode = #tpu.pipeline_mode<synchronous>, transform_indices = @transform_1, window_bounds = array<i64: 384, 32>}, {pipeline_mode = #tpu.pipeline_mode<synchronous>, transform_indices = @transform_2, window_bounds = array<i64: 32, 128>}, {pipeline_mode = #tpu.pipeline_mode<synchronous>, transform_indices = @transform_3, window_bounds = array<i64: 32, 3>}, {pipeline_mode = #tpu.pipeline_mode<synchronous>, transform_indices = @transform_4, window_bounds = array<i64: 128, 128>}, {transform_indices = @transform_5, window_bounds = array<i64: 1, 32, 256>}]} {
    %c0 = arith.constant 0 : index
    %c0_0 = arith.constant 0 : index
    %0 = vector.load %arg2[%c0, %c0_0] : memref<384x32xbf16, #tpu.memory_space<vmem>>, vector<384x32xbf16>
    %c0_1 = arith.constant 0 : index
    %c0_2 = arith.constant 0 : index
    %1 = vector.load %arg3[%c0_1, %c0_2] : memref<32x128xbf16, #tpu.memory_space<vmem>>, vector<32x128xbf16>
    %c0_3 = arith.constant 0 : index
    %c0_4 = arith.constant 0 : index
    %2 = vector.load %arg4[%c0_3, %c0_4] : memref<32x3xf32, #tpu.memory_space<vmem>>, vector<32x1xf32>
    %c0_5 = arith.constant 0 : index
    %c1 = arith.constant 1 : index
    %3 = vector.load %arg4[%c0_5, %c1] : memref<32x3xf32, #tpu.memory_space<vmem>>, vector<32x1xf32>
    %c0_6 = arith.constant 0 : index
    %c2 = arith.constant 2 : index
    %4 = vector.load %arg4[%c0_6, %c2] : memref<32x3xf32, #tpu.memory_space<vmem>>, vector<32x1xf32>
    %c0_7 = arith.constant 0 : index
    %c0_8 = arith.constant 0 : index
    %5 = vector.load %arg5[%c0_7, %c0_8] : memref<128x128xf32, #tpu.memory_space<vmem>>, vector<128x128xf32>
    %c0_9 = arith.constant 0 : index
    %c0_10 = arith.constant 0 : index
    %c0_11 = arith.constant 0 : index
    %6 = vector.load %arg1[%c0_9, %c0_10, %c0_11] : memref<1x32x256xbf16, #tpu.memory_space<vmem>>, vector<1x32x256xbf16>
    %7 = vector.shape_cast %6 : vector<1x32x256xbf16> to vector<32x256xbf16>
    %cst = arith.constant dense<0.000000e+00> : vector<384x256xf32>
    %8 = tpu.matmul %0, %7, %cst {dimension_numbers = #tpu.dot_dimension_numbers<[1], [0], [0], [1], [0, 0, 1, 1], [], []>} : vector<384x32xbf16>, vector<32x256xbf16>, vector<384x256xf32> -> vector<384x256xf32>
    %9 = vector.extract_strided_slice %8 {offsets = [0, 0], sizes = [32, 256], strides = [1, 1]} : vector<384x256xf32> to vector<32x256xf32>
    %cst_12 = arith.constant dense<0xFF800000> : vector<256xf32>
    %10 = vector.multi_reduction <maximumf>, %9, %cst_12 [0] : vector<32x256xf32> to vector<256xf32>
    %11 = vector.shape_cast %10 : vector<256xf32> to vector<1x256xf32>
    %12 = vector.broadcast %11 : vector<1x256xf32> to vector<32x256xf32>
    %13 = arith.subf %9, %12 : vector<32x256xf32>
    %14 = math.exp %13 : vector<32x256xf32>
    %cst_13 = arith.constant dense<0.000000e+00> : vector<256xf32>
    %15 = vector.multi_reduction <add>, %14, %cst_13 [0] : vector<32x256xf32> to vector<256xf32>
    %16 = vector.shape_cast %15 : vector<256xf32> to vector<1x256xf32>
    %17 = tpu.reciprocal %16 {approx = true} : vector<1x256xf32> -> vector<1x256xf32>
    %18 = vector.broadcast %17 : vector<1x256xf32> to vector<32x256xf32>
    %19 = arith.mulf %14, %18 : vector<32x256xf32>
    %20 = arith.truncf %19 : vector<32x256xf32> to vector<32x256xbf16>
    %c0_14 = arith.constant 0 : index
    %c0_15 = arith.constant 0 : index
    %21 = vector.load %arg7[%c0_14, %c0_15] : memref<128x256xbf16, #tpu.memory_space<vmem>>, vector<32x256xbf16>
    tpu.vector_store %arg7[%c0_14, %c0_15], %20 {strides = array<i32>} : memref<128x256xbf16, #tpu.memory_space<vmem>>, vector<32x256xbf16>,
    %22 = vector.extract_strided_slice %8 {offsets = [32, 0], sizes = [32, 256], strides = [1, 1]} : vector<384x256xf32> to vector<32x256xf32>
    %cst_16 = arith.constant dense<0xFF800000> : vector<256xf32>
    %23 = vector.multi_reduction <maximumf>, %22, %cst_16 [0] : vector<32x256xf32> to vector<256xf32>
    %24 = vector.shape_cast %23 : vector<256xf32> to vector<1x256xf32>
    %25 = vector.broadcast %24 : vector<1x256xf32> to vector<32x256xf32>
    %26 = arith.subf %22, %25 : vector<32x256xf32>
    %27 = math.exp %26 : vector<32x256xf32>
    %cst_17 = arith.constant dense<0.000000e+00> : vector<256xf32>
    %28 = vector.multi_reduction <add>, %27, %cst_17 [0] : vector<32x256xf32> to vector<256xf32>
    %29 = vector.shape_cast %28 : vector<256xf32> to vector<1x256xf32>
    %30 = tpu.reciprocal %29 {approx = true} : vector<1x256xf32> -> vector<1x256xf32>
    %31 = vector.broadcast %30 : vector<1x256xf32> to vector<32x256xf32>
    %32 = arith.mulf %27, %31 : vector<32x256xf32>
    %33 = arith.truncf %32 : vector<32x256xf32> to vector<32x256xbf16>
    %c32 = arith.constant 32 : index
    %c0_18 = arith.constant 0 : index
    %34 = vector.load %arg7[%c32, %c0_18] : memref<128x256xbf16, #tpu.memory_space<vmem>>, vector<32x256xbf16>
    tpu.vector_store %arg7[%c32, %c0_18], %33 {strides = array<i32>} : memref<128x256xbf16, #tpu.memory_space<vmem>>, vector<32x256xbf16>,
    %35 = vector.extract_strided_slice %8 {offsets = [64, 0], sizes = [32, 256], strides = [1, 1]} : vector<384x256xf32> to vector<32x256xf32>
    %cst_19 = arith.constant dense<0xFF800000> : vector<256xf32>
    %36 = vector.multi_reduction <maximumf>, %35, %cst_19 [0] : vector<32x256xf32> to vector<256xf32>
    %37 = vector.shape_cast %36 : vector<256xf32> to vector<1x256xf32>
    %38 = vector.broadcast %37 : vector<1x256xf32> to vector<32x256xf32>
    %39 = arith.subf %35, %38 : vector<32x256xf32>
    %40 = math.exp %39 : vector<32x256xf32>
    %cst_20 = arith.constant dense<0.000000e+00> : vector<256xf32>
    %41 = vector.multi_reduction <add>, %40, %cst_20 [0] : vector<32x256xf32> to vector<256xf32>
    %42 = vector.shape_cast %41 : vector<256xf32> to vector<1x256xf32>
    %43 = tpu.reciprocal %42 {approx = true} : vector<1x256xf32> -> vector<1x256xf32>
    %44 = vector.broadcast %43 : vector<1x256xf32> to vector<32x256xf32>
    %45 = arith.mulf %40, %44 : vector<32x256xf32>
    %46 = arith.truncf %45 : vector<32x256xf32> to vector<32x256xbf16>
    %c64 = arith.constant 64 : index
    %c0_21 = arith.constant 0 : index
    %47 = vector.load %arg7[%c64, %c0_21] : memref<128x256xbf16, #tpu.memory_space<vmem>>, vector<32x256xbf16>
    tpu.vector_store %arg7[%c64, %c0_21], %46 {strides = array<i32>} : memref<128x256xbf16, #tpu.memory_space<vmem>>, vector<32x256xbf16>,
    %48 = vector.extract_strided_slice %8 {offsets = [96, 0], sizes = [32, 256], strides = [1, 1]} : vector<384x256xf32> to vector<32x256xf32>
    %cst_22 = arith.constant dense<0xFF800000> : vector<256xf32>
    %49 = vector.multi_reduction <maximumf>, %48, %cst_22 [0] : vector<32x256xf32> to vector<256xf32>
    %50 = vector.shape_cast %49 : vector<256xf32> to vector<1x256xf32>
    %51 = vector.broadcast %50 : vector<1x256xf32> to vector<32x256xf32>
    %52 = arith.subf %48, %51 : vector<32x256xf32>
    %53 = math.exp %52 : vector<32x256xf32>
    %cst_23 = arith.constant dense<0.000000e+00> : vector<256xf32>
    %54 = vector.multi_reduction <add>, %53, %cst_23 [0] : vector<32x256xf32> to vector<256xf32>
    %55 = vector.shape_cast %54 : vector<256xf32> to vector<1x256xf32>
    %56 = tpu.reciprocal %55 {approx = true} : vector<1x256xf32> -> vector<1x256xf32>
    %57 = vector.broadcast %56 : vector<1x256xf32> to vector<32x256xf32>
    %58 = arith.mulf %53, %57 : vector<32x256xf32>
    %59 = arith.truncf %58 : vector<32x256xf32> to vector<32x256xbf16>
    %c96 = arith.constant 96 : index
    %c0_24 = arith.constant 0 : index
    %60 = vector.load %arg7[%c96, %c0_24] : memref<128x256xbf16, #tpu.memory_space<vmem>>, vector<32x256xbf16>
    tpu.vector_store %arg7[%c96, %c0_24], %59 {strides = array<i32>} : memref<128x256xbf16, #tpu.memory_space<vmem>>, vector<32x256xbf16>,
    %61 = vector.extract_strided_slice %8 {offsets = [128, 0], sizes = [128, 256], strides = [1, 1]} : vector<384x256xf32> to vector<128x256xf32>
    %cst_25 = arith.constant dense<0xFF800000> : vector<128xf32>
    %62 = vector.multi_reduction <maximumf>, %61, %cst_25 [1] : vector<128x256xf32> to vector<128xf32>
    %63 = vector.shape_cast %62 : vector<128xf32> to vector<128x1xf32>
    %64 = vector.broadcast %63 : vector<128x1xf32> to vector<128x256xf32>
    %65 = arith.subf %61, %64 : vector<128x256xf32>
    %66 = math.exp %65 : vector<128x256xf32>
    %cst_26 = arith.constant dense<0.000000e+00> : vector<128xf32>
    %67 = vector.multi_reduction <add>, %66, %cst_26 [1] : vector<128x256xf32> to vector<128xf32>
    %68 = vector.shape_cast %67 : vector<128xf32> to vector<128x1xf32>
    %69 = tpu.reciprocal %68 {approx = true} : vector<128x1xf32> -> vector<128x1xf32>
    %70 = vector.broadcast %69 : vector<128x1xf32> to vector<128x256xf32>
    %71 = arith.mulf %66, %70 : vector<128x256xf32>
    %72 = vector.extract_strided_slice %8 {offsets = [256, 0], sizes = [128, 256], strides = [1, 1]} : vector<384x256xf32> to vector<128x256xf32>
    %73 = arith.truncf %72 : vector<128x256xf32> to vector<128x256xbf16>
    %74 = arith.truncf %71 : vector<128x256xf32> to vector<128x256xbf16>
    %cst_27 = arith.constant dense<0.000000e+00> : vector<128x128xf32>
    %75 = tpu.matmul %73, %74, %cst_27 {dimension_numbers = #tpu.dot_dimension_numbers<[1], [1], [0], [0], [0, 0, 1, 0], [], []>} : vector<128x256xbf16>, vector<128x256xbf16>, vector<128x128xf32> -> vector<128x128xf32>
    %76 = arith.mulf %75, %5 : vector<128x128xf32>
    %77 = arith.truncf %76 : vector<128x128xf32> to vector<128x128xbf16>
    %c0_28 = arith.constant 0 : index
    %c0_29 = arith.constant 0 : index
    %78 = vector.load %arg7[%c0_28, %c0_29] : memref<128x256xbf16, #tpu.memory_space<vmem>>, vector<128x256xbf16>
    %cst_30 = arith.constant dense<0.000000e+00> : vector<128x256xf32>
    %79 = tpu.matmul %77, %78, %cst_30 {dimension_numbers = #tpu.dot_dimension_numbers<[1], [0], [0], [1], [0, 0, 1, 1], [], []>} : vector<128x128xbf16>, vector<128x256xbf16>, vector<128x256xf32> -> vector<128x256xf32>
    %80 = arith.truncf %79 : vector<128x256xf32> to vector<128x256xbf16>
    %cst_31 = arith.constant dense<0.000000e+00> : vector<32x256xf32>
    %81 = tpu.matmul %1, %80, %cst_31 {dimension_numbers = #tpu.dot_dimension_numbers<[1], [0], [0], [1], [0, 0, 1, 1], [], []>} : vector<32x128xbf16>, vector<128x256xbf16>, vector<32x256xf32> -> vector<32x256xf32>
    %82 = vector.broadcast %2 : vector<32x1xf32> to vector<32x256xf32>
    %83 = arith.addf %81, %82 : vector<32x256xf32>
    %84 = vector.shape_cast %83 : vector<32x256xf32> to vector<1x32x256xf32>
    %cst_32 = arith.constant dense<0.000000e+00> : vector<1xf32>
    %85 = vector.multi_reduction <add>, %84, %cst_32 [1, 2] : vector<1x32x256xf32> to vector<1xf32>
    %86 = vector.shape_cast %85 : vector<1xf32> to vector<1x1x1xf32>
    %87 = vector.extract %86[0, 0, 0] : f32 from vector<1x1x1xf32>
    %88 = vector.broadcast %87 : f32 to vector<1x1xf32>
    %89 = arith.mulf %83, %83 : vector<32x256xf32>
    %90 = vector.shape_cast %89 : vector<32x256xf32> to vector<1x32x256xf32>
    %cst_33 = arith.constant dense<0.000000e+00> : vector<1xf32>
    %91 = vector.multi_reduction <add>, %90, %cst_33 [1, 2] : vector<1x32x256xf32> to vector<1xf32>
    %92 = vector.shape_cast %91 : vector<1xf32> to vector<1x1x1xf32>
    %93 = vector.extract %92[0, 0, 0] : f32 from vector<1x1x1xf32>
    %94 = vector.broadcast %93 : f32 to vector<1x1xf32>
    %cst_34 = arith.constant 1.22070313E-4 : f32
    %95 = vector.broadcast %cst_34 : f32 to vector<1x1xf32>
    %96 = arith.mulf %88, %95 : vector<1x1xf32>
    %cst_35 = arith.constant 1.22070313E-4 : f32
    %97 = vector.broadcast %cst_35 : f32 to vector<1x1xf32>
    %98 = arith.mulf %94, %97 : vector<1x1xf32>
    %99 = arith.mulf %96, %96 : vector<1x1xf32>
    %100 = arith.subf %98, %99 : vector<1x1xf32>
    %101 = vector.broadcast %96 : vector<1x1xf32> to vector<32x256xf32>
    %102 = arith.subf %83, %101 : vector<32x256xf32>
    %cst_36 = arith.constant 9.99999974E-6 : f32
    %103 = vector.broadcast %cst_36 : f32 to vector<1x1xf32>
    %104 = arith.addf %100, %103 : vector<1x1xf32>
    %105 = math.rsqrt %104 : vector<1x1xf32>
    %106 = vector.broadcast %105 : vector<1x1xf32> to vector<32x256xf32>
    %107 = arith.mulf %102, %106 : vector<32x256xf32>
    %108 = vector.broadcast %3 : vector<32x1xf32> to vector<32x256xf32>
    %109 = arith.mulf %108, %107 : vector<32x256xf32>
    %110 = vector.broadcast %4 : vector<32x1xf32> to vector<32x256xf32>
    %111 = arith.addf %109, %110 : vector<32x256xf32>
    %c0_37 = arith.constant 0 : index
    %c0_38 = arith.constant 0 : index
    %c0_39 = arith.constant 0 : index
    %112 = vector.load %arg6[%c0_37, %c0_38, %c0_39] : memref<1x32x256xf32, #tpu.memory_space<vmem>>, vector<1x32x256xf32>
    %113 = vector.shape_cast %112 : vector<1x32x256xf32> to vector<32x256xf32>
    %114 = vector.shape_cast %111 : vector<32x256xf32> to vector<1x32x256xf32>
    tpu.vector_store %arg6[%c0_37, %c0_38, %c0_39], %114 {strides = array<i32>} : memref<1x32x256xf32, #tpu.memory_space<vmem>>, vector<1x32x256xf32>,
    return
  }
  func.func @transform_0(%arg0: i32) -> (i32, i32, i32) {
    %c0_i32 = arith.constant 0 : i32
    %c0_i32_0 = arith.constant 0 : i32
    %c0_i32_1 = arith.constant 0 : i32
    return %arg0, %c0_i32, %c0_i32_0 : i32, i32, i32
  }
  func.func @transform_1(%arg0: i32) -> (i32, i32) {
    %c0_i32 = arith.constant 0 : i32
    %c0_i32_0 = arith.constant 0 : i32
    %c0_i32_1 = arith.constant 0 : i32
    return %c0_i32, %c0_i32_0 : i32, i32
  }
  func.func @transform_2(%arg0: i32) -> (i32, i32) {
    %c0_i32 = arith.constant 0 : i32
    %c0_i32_0 = arith.constant 0 : i32
    %c0_i32_1 = arith.constant 0 : i32
    return %c0_i32, %c0_i32_0 : i32, i32
  }
  func.func @transform_3(%arg0: i32) -> (i32, i32) {
    %c0_i32 = arith.constant 0 : i32
    %c0_i32_0 = arith.constant 0 : i32
    %c0_i32_1 = arith.constant 0 : i32
    return %c0_i32, %c0_i32_0 : i32, i32
  }
  func.func @transform_4(%arg0: i32) -> (i32, i32) {
    %c0_i32 = arith.constant 0 : i32
    %c0_i32_0 = arith.constant 0 : i32
    %c0_i32_1 = arith.constant 0 : i32
    return %c0_i32, %c0_i32_0 : i32, i32
  }
  func.func @transform_5(%arg0: i32) -> (i32, i32, i32) {
    %c0_i32 = arith.constant 0 : i32
    %c0_i32_0 = arith.constant 0 : i32
    %c0_i32_1 = arith.constant 0 : i32
    return %arg0, %c0_i32, %c0_i32_0 : i32, i32, i32
  }
}

</mosaic_0001>

<llo_original>
// kernel: tpu_custom_call.1
$region0: #{tpu_custom_call.1}
  #allocation0 [shape = 'u32[]', space=smem, size = 0x4, offset = 0x4, fixed_abs, tag = 'smem constant byte address 0x4 - core index']
  #allocation1 [shape = 'u32[144,128]{1,0:T(1,128)}', space=vmem, size = 0x12000, scoped, tag = 'internal scratch']
  #allocation2 [shape = 'bf16[128,256]{1,0:T(16,128)(2,1)}', space=vmem, size = 0x10000, scoped, tag = 'scratch operand']
  %s0 = inlined_call_operand.vmem [shape: bf16[2,32,256], index: 0, kind: input, shape index: {}]
  %s1 = inlined_call_operand.vmem [shape: bf16[384,32], index: 1, kind: input, shape index: {}]
  %s2 = inlined_call_operand.vmem [shape: bf16[32,128], index: 2, kind: input, shape index: {}]
  %s3 = inlined_call_operand.vmem [shape: f32[32,3], index: 3, kind: input, shape index: {}]
  %s4 = inlined_call_operand.vmem [shape: f32[128,128], index: 4, kind: input, shape index: {}]
  %s5 = inlined_call_operand.hbm [shape: f32[2,32,256], index: 5, kind: output, shape index: {}]
  %s6 = sld [smem:[#allocation0]]
  $region53: #{tpu_custom_call.1} parent=0
    _
  %s8 = ssub.s32 1, %s6
  %s9 = scalar_select 0, %s8, %s6
  $region1: #{tpu_custom_call.1} parent=0
    #allocation3 [shape = 'u8[65536]{0}', space=vmem, size = 0x10000, scoped, tag = 'output window, operand 0']
    #allocation4 [shape = 's32[2]{0}', space=sflag, size = 0x8, scoped, tag = 'scoped memory for tpu_custom_call.1']
    %10 = vsyncpa [#allocation4], 0
    %s11 = scalar_lea.sflag [#allocation4], 1
    %12 = vsyncpa %s11, 0
    loop: start=0, step=1, limit=4
    $region2: #{tpu_custom_call.1} parent=1 // loop_pre_header
      _
    $region3: #{tpu_custom_call.1} parent=1 // loop_header
      %s14 = sphi 0, %s18
      %p15 = scmp.ge.s32.totalorder %s14, 4
      %s24 = sphi 0, %s26
      %s27 = sphi 0, %s24
      %s28 = sphi 0, %s27
      %s44 = sphi 0, %s28
      %s48 = sphi 0, %s48
      %s50 = sphi 0, %s48
      %s51 = sphi 0, %s50
      %s65 = sphi 0, %s51
      %s69 = sphi 0, %s69
      %s71 = sphi 0, %s69
      %s72 = sphi 0, %s71
      %s86 = sphi 0, %s72
      %s90 = sphi 0, %s90
      %s92 = sphi 0, %s90
      %s93 = sphi 0, %s92
      %s107 = sphi 0, %s93
      %s111 = sphi 0, %s111
      %s113 = sphi 0, %s111
      %s114 = sphi 0, %s113
      %s128 = sphi 0, %s114
      %s134 = sphi 0, %s136
      %s137 = sphi 0, %s134
      %s138 = sphi 0, %s137
      %s154 = sphi 0, %s138
    $region4: #{tpu_custom_call.1} parent=1 // loop_header_branch
      %17 = sbr.rel (%p15) target = $region8
    $region5: #{tpu_custom_call.1} parent=1 // loop_body
      %s19 = ssub.s32 %s14, 1
      %s20 = ssub.s32 %s14, 2
      %s21 = sadd.s32 %s14, 1
      %s22 = ssub.s32 %s14, %s21
      %p23 = scmp.eq.s32.totalorder %s22, 0
      %s25 = sadd.s32 %s24, 1
      %s26 = scalar_select %p23, %s24, %s25
      %p29 = pneg %p23
      %p30 = scmp.eq.s32.totalorder %s14, 1
      %p31 = por %p29, %p30
      %p32 = scmp.ne.s32.totalorder %s24, %s27
      %p33 = scmp.eq.s32.totalorder %s14, 0
      %p34 = por %p32, %p33
      %p35 = scmp.ne.s32.totalorder %s24, %s27
      %p36 = scmp.eq.s32.totalorder %s19, 1
      %p37 = por %p35, %p36
      %p38 = scmp.ne.s32.totalorder %s27, %s28
      %p39 = scmp.eq.s32.totalorder %s19, 0
      %p40 = por %p38, %p39
      %p41 = scmp.ne.s32.totalorder %s27, %s28
      %p42 = scmp.eq.s32.totalorder %s20, 1
      %p43 = por %p41, %p42
      %p45 = scmp.ne.s32.totalorder %s28, %s44
      %p46 = scmp.eq.s32.totalorder %s20, 0
      %p47 = por %p45, %p46
      %s49 = sadd.s32 %s48, 1
      %p52 = scmp.eq.s32.totalorder %s14, 1
      %p53 = scmp.ne.s32.totalorder %s48, %s50
      %p54 = scmp.eq.s32.totalorder %s14, 0
      %p55 = por %p53, %p54
      %p56 = scmp.ne.s32.totalorder %s48, %s50
      %p57 = scmp.eq.s32.totalorder %s19, 1
      %p58 = por %p56, %p57
      %p59 = scmp.ne.s32.totalorder %s50, %s51
      %p60 = scmp.eq.s32.totalorder %s19, 0
      %p61 = por %p59, %p60
      %p62 = scmp.ne.s32.totalorder %s50, %s51
      %p63 = scmp.eq.s32.totalorder %s20, 1
      %p64 = por %p62, %p63
      %p66 = scmp.ne.s32.totalorder %s51, %s65
      %p67 = scmp.eq.s32.totalorder %s20, 0
      %p68 = por %p66, %p67
      %s70 = sadd.s32 %s69, 1
      %p73 = scmp.eq.s32.totalorder %s14, 1
      %p74 = scmp.ne.s32.totalorder %s69, %s71
      %p75 = scmp.eq.s32.totalorder %s14, 0
      %p76 = por %p74, %p75
      %p77 = scmp.ne.s32.totalorder %s69, %s71
      %p78 = scmp.eq.s32.totalorder %s19, 1
      %p79 = por %p77, %p78
      %p80 = scmp.ne.s32.totalorder %s71, %s72
      %p81 = scmp.eq.s32.totalorder %s19, 0
      %p82 = por %p80, %p81
      %p83 = scmp.ne.s32.totalorder %s71, %s72
      %p84 = scmp.eq.s32.totalorder %s20, 1
      %p85 = por %p83, %p84
      %p87 = scmp.ne.s32.totalorder %s72, %s86
      %p88 = scmp.eq.s32.totalorder %s20, 0
      %p89 = por %p87, %p88
      %s91 = sadd.s32 %s90, 1
      %p94 = scmp.eq.s32.totalorder %s14, 1
      %p95 = scmp.ne.s32.totalorder %s90, %s92
      %p96 = scmp.eq.s32.totalorder %s14, 0
      %p97 = por %p95, %p96
      %p98 = scmp.ne.s32.totalorder %s90, %s92
      %p99 = scmp.eq.s32.totalorder %s19, 1
      %p100 = por %p98, %p99
      %p101 = scmp.ne.s32.totalorder %s92, %s93
      %p102 = scmp.eq.s32.totalorder %s19, 0
      %p103 = por %p101, %p102
      %p104 = scmp.ne.s32.totalorder %s92, %s93
      %p105 = scmp.eq.s32.totalorder %s20, 1
      %p106 = por %p104, %p105
      %p108 = scmp.ne.s32.totalorder %s93, %s107
      %p109 = scmp.eq.s32.totalorder %s20, 0
      %p110 = por %p108, %p109
      %s112 = sadd.s32 %s111, 1
      %p115 = scmp.eq.s32.totalorder %s14, 1
      %p116 = scmp.ne.s32.totalorder %s111, %s113
      %p117 = scmp.eq.s32.totalorder %s14, 0
      %p118 = por %p116, %p117
      %p119 = scmp.ne.s32.totalorder %s111, %s113
      %p120 = scmp.eq.s32.totalorder %s19, 1
      %p121 = por %p119, %p120
      %p122 = scmp.ne.s32.totalorder %s113, %s114
      %p123 = scmp.eq.s32.totalorder %s19, 0
      %p124 = por %p122, %p123
      %p125 = scmp.ne.s32.totalorder %s113, %s114
      %p126 = scmp.eq.s32.totalorder %s20, 1
      %p127 = por %p125, %p126
      %p129 = scmp.ne.s32.totalorder %s114, %s128
      %p130 = scmp.eq.s32.totalorder %s20, 0
      %p131 = por %p129, %p130
      %s132 = ssub.s32 %s14, %s21
      %p133 = scmp.eq.s32.totalorder %s132, 0
      %s135 = sadd.s32 %s134, 1
      %s136 = scalar_select %p133, %s134, %s135
      %p139 = pneg %p133
      %p140 = scmp.eq.s32.totalorder %s14, 1
      %p141 = por %p139, %p140
      %p142 = scmp.ne.s32.totalorder %s134, %s137
      %p143 = scmp.eq.s32.totalorder %s14, 0
      %p144 = por %p142, %p143
      %p145 = scmp.ne.s32.totalorder %s134, %s137
      %p146 = scmp.eq.s32.totalorder %s19, 1
      %p147 = por %p145, %p146
      %p148 = scmp.ne.s32.totalorder %s137, %s138
      %p149 = scmp.eq.s32.totalorder %s19, 0
      %p150 = por %p148, %p149
      %p151 = scmp.ne.s32.totalorder %s137, %s138
      %p152 = scmp.eq.s32.totalorder %s20, 1
      %p153 = por %p151, %p152
      %p155 = scmp.ne.s32.totalorder %s138, %s154
      %p156 = scmp.eq.s32.totalorder %s20, 0
      %p157 = por %p155, %p156
      %p158 = scmp.le.s32.totalorder 1, %s14
      %p159 = scmp.lt.s32.totalorder %s14, 3
      %p160 = pnand %p158, %p159
      %p161 = pneg %p160
      // Predicated region
      $region9: #{tpu_custom_call.1} parent=5 // pred_check
        _
      $region10: #{tpu_custom_call.1} parent=5 // pred_check_branch
        %163 = sbr.rel (%p160) target = $region12
      $region11: #{tpu_custom_call.1} parent=5 // pred_region
        %s164 = ssub.s32 %s14, 1
        // Predicated region
        $region13: #{tpu_custom_call.1} parent=11 // pred_check
          %p165 = pneg %p61
        $region14: #{tpu_custom_call.1} parent=11 // pred_check_branch
          %167 = sbr.rel (%p165) target = $region16
        $region15: #{tpu_custom_call.1} parent=11 // pred_region
          _
        $region16: #{tpu_custom_call.1} parent=11 // pred_fallthru
          _
        // Predicated region
        $region17: #{tpu_custom_call.1} parent=11 // pred_check
          %p168 = pneg %p82
        $region18: #{tpu_custom_call.1} parent=11 // pred_check_branch
          %170 = sbr.rel (%p168) target = $region20
        $region19: #{tpu_custom_call.1} parent=11 // pred_region
          _
        $region20: #{tpu_custom_call.1} parent=11 // pred_fallthru
          _
        // Predicated region
        $region21: #{tpu_custom_call.1} parent=11 // pred_check
          %p171 = pneg %p103
        $region22: #{tpu_custom_call.1} parent=11 // pred_check_branch
          %173 = sbr.rel (%p171) target = $region24
        $region23: #{tpu_custom_call.1} parent=11 // pred_region
          _
        $region24: #{tpu_custom_call.1} parent=11 // pred_fallthru
          _
        // Predicated region
        $region25: #{tpu_custom_call.1} parent=11 // pred_check
          %p174 = pneg %p124
        $region26: #{tpu_custom_call.1} parent=11 // pred_check_branch
          %176 = sbr.rel (%p174) target = $region28
        $region27: #{tpu_custom_call.1} parent=11 // pred_region
          _
        $region28: #{tpu_custom_call.1} parent=11 // pred_fallthru
          _
      $region12: #{tpu_custom_call.1} parent=5 // pred_fallthru
        _
      %p177 = scmp.lt.s32.totalorder %s14, 2
      // Predicated region
      $region29: #{tpu_custom_call.1} parent=5 // pred_check
        %p178 = pneg %p177
      $region30: #{tpu_custom_call.1} parent=5 // pred_check_branch
        %180 = sbr.rel (%p178) target = $region32
      $region31: #{tpu_custom_call.1} parent=5 // pred_region
        // Predicated region
        $region33: #{tpu_custom_call.1} parent=31 // pred_check
          %p181 = pneg %p34
        $region34: #{tpu_custom_call.1} parent=31 // pred_check_branch
          %183 = sbr.rel (%p181) target = $region36
        $region35: #{tpu_custom_call.1} parent=31 // pred_region
          %p184 = scmp.lt.s32.totalorder %s14, 1
          %s185 = scalar_select %p184, %s14, 1
          %s186 = smul.addr %s185, 8
          %s187 = smul.addr %s186, 4
          %s188 = scalar_lea.vmem %s0, %s187
        $region36: #{tpu_custom_call.1} parent=31 // pred_fallthru
          _
      $region32: #{tpu_custom_call.1} parent=5 // pred_fallthru
        _
      %p189 = scmp.le.s32.totalorder 1, %s14
      %p190 = scmp.lt.s32.totalorder %s14, 3
      %p191 = pnand %p189, %p190
      %p192 = pneg %p191
      // Predicated region
      $region37: #{tpu_custom_call.1} parent=5 // pred_check
        _
      $region38: #{tpu_custom_call.1} parent=5 // pred_check_branch
        %194 = sbr.rel (%p191) target = $region40
      $region39: #{tpu_custom_call.1} parent=5 // pred_region
        %s195 = ssub.s32 %s14, 1
        %p196 = scmp.lt.s32.totalorder %s19, 1
        %s197 = scalar_select %p196, %s19, 1
        %s198 = smul.addr %s197, 8
        %s199 = smul.addr %s198, 4
        %s200 = scalar_lea.vmem %s0, %s199
        %p201 = pneg %p40
        %p202 = pneg %p37
        %p203 = pneg %p61
        %p204 = pneg %p58
        %p205 = pneg %p82
        %p206 = pneg %p79
        %p207 = pneg %p103
        %p208 = pneg %p100
        %p209 = pneg %p124
        %p210 = pneg %p121
        %p211 = pneg %p150
        %p212 = pneg %p147
        %s213 = sand.u32 %s137, 1
        %s214 = scalar_lea.sflag [#allocation4], %s213
        %s215 = sand.u32 %s137, 1
        %s216 = smul.addr %s215, 64
        %s217 = scalar_lea.vmem [#allocation3], %s216
        %p218 = scmp.lt.s32.totalorder %s19, 1
        %s219 = scalar_select %p218, %s19, 1
        %s220 = smul.addr %s219, 8
        %s221 = smul.addr %s220, 4
        %s222 = scalar_lea.vmem %s0, %s221
        %v224 = vld [vmem:[%s1] sm:$0xf]
        %v225 = vld [vmem:[%s1 + $0x4] sm:$0xf]
        %v226 = vld [vmem:[%s1 + $0x8] sm:$0xf]
        %v227 = vld [vmem:[%s1 + $0xc] sm:$0xf]
        %v228 = vld [vmem:[%s1 + $0x10] sm:$0xf]
        %v229 = vld [vmem:[%s1 + $0x14] sm:$0xf]
        %v230 = vld [vmem:[%s1 + $0x18] sm:$0xf]
        %v231 = vld [vmem:[%s1 + $0x1c] sm:$0xf]
        %v232 = vld [vmem:[%s1 + $0x20] sm:$0xf]
        %v233 = vld [vmem:[%s1 + $0x24] sm:$0xf]
        %v234 = vld [vmem:[%s1 + $0x28] sm:$0xf]
        %v235 = vld [vmem:[%s1 + $0x2c] sm:$0xf]
        %v236 = vld [vmem:[%s1 + $0x30] sm:$0xf]
        %v237 = vld [vmem:[%s1 + $0x34] sm:$0xf]
        %v238 = vld [vmem:[%s1 + $0x38] sm:$0xf]
        %v239 = vld [vmem:[%s1 + $0x3c] sm:$0xf]
        %v240 = vld [vmem:[%s1 + $0x40] sm:$0xf]
        %v241 = vld [vmem:[%s1 + $0x44] sm:$0xf]
        %v242 = vld [vmem:[%s1 + $0x48] sm:$0xf]
        %v243 = vld [vmem:[%s1 + $0x4c] sm:$0xf]
        %v244 = vld [vmem:[%s1 + $0x50] sm:$0xf]
        %v245 = vld [vmem:[%s1 + $0x54] sm:$0xf]
        %v246 = vld [vmem:[%s1 + $0x58] sm:$0xf]
        %v247 = vld [vmem:[%s1 + $0x5c] sm:$0xf]
        %v248 = vld [vmem:[%s1 + $0x60] sm:$0xf]
        %v249 = vld [vmem:[%s1 + $0x64] sm:$0xf]
        %v250 = vld [vmem:[%s1 + $0x68] sm:$0xf]
        %v251 = vld [vmem:[%s1 + $0x6c] sm:$0xf]
        %v252 = vld [vmem:[%s1 + $0x70] sm:$0xf]
        %v253 = vld [vmem:[%s1 + $0x74] sm:$0xf]
        %v254 = vld [vmem:[%s1 + $0x78] sm:$0xf]
        %v255 = vld [vmem:[%s1 + $0x7c] sm:$0xf]
        %v256 = vld [vmem:[%s1 + $0x80] sm:$0xf]
        %v257 = vld [vmem:[%s1 + $0x84] sm:$0xf]
        %v258 = vld [vmem:[%s1 + $0x88] sm:$0xf]
        %v259 = vld [vmem:[%s1 + $0x8c] sm:$0xf]
        %v260 = vld [vmem:[%s1 + $0x90] sm:$0xf]
        %v261 = vld [vmem:[%s1 + $0x94] sm:$0xf]
        %v262 = vld [vmem:[%s1 + $0x98] sm:$0xf]
        %v263 = vld [vmem:[%s1 + $0x9c] sm:$0xf]
        %v264 = vld [vmem:[%s1 + $0xa0] sm:$0xf]
        %v265 = vld [vmem:[%s1 + $0xa4] sm:$0xf]
        %v266 = vld [vmem:[%s1 + $0xa8] sm:$0xf]
        %v267 = vld [vmem:[%s1 + $0xac] sm:$0xf]
        %v268 = vld [vmem:[%s1 + $0xb0] sm:$0xf]
        %v269 = vld [vmem:[%s1 + $0xb4] sm:$0xf]
        %v270 = vld [vmem:[%s1 + $0xb8] sm:$0xf]
        %v271 = vld [vmem:[%s1 + $0xbc] sm:$0xf]
        %v272 = vld [vmem:[%s2] sm:$0xf]
        %v273 = vld [vmem:[%s2 + $0x4] sm:$0xf]
        %v274 = vld [vmem:[%s2 + $0x8] sm:$0xf]
        %v275 = vld [vmem:[%s2 + $0xc] sm:$0xf]
        %v276 = vld [vmem:[%s3] sm:$0xff]
        %v277 = vld [vmem:[%s3 + $0x8] sm:$0xff]
        %v278 = vld [vmem:[%s3 + $0x10] sm:$0xff]
        %v279 = vld [vmem:[%s3 + $0x18] sm:$0xff]
        %v280 = vld [vmem:[%s4] sm:$0xff]
        %v281 = vld [vmem:[%s4 + $0x8] sm:$0xff]
        %v282 = vld [vmem:[%s4 + $0x10] sm:$0xff]
        %v283 = vld [vmem:[%s4 + $0x18] sm:$0xff]
        %v284 = vld [vmem:[%s4 + $0x20] sm:$0xff]
        %v285 = vld [vmem:[%s4 + $0x28] sm:$0xff]
        %v286 = vld [vmem:[%s4 + $0x30] sm:$0xff]
        %v287 = vld [vmem:[%s4 + $0x38] sm:$0xff]
        %v288 = vld [vmem:[%s4 + $0x40] sm:$0xff]
        %v289 = vld [vmem:[%s4 + $0x48] sm:$0xff]
        %v290 = vld [vmem:[%s4 + $0x50] sm:$0xff]
        %v291 = vld [vmem:[%s4 + $0x58] sm:$0xff]
        %v292 = vld [vmem:[%s4 + $0x60] sm:$0xff]
        %v293 = vld [vmem:[%s4 + $0x68] sm:$0xff]
        %v294 = vld [vmem:[%s4 + $0x70] sm:$0xff]
        %v295 = vld [vmem:[%s4 + $0x78] sm:$0xff]
        %v296 = vld [vmem:[%s222] sm:$0xff]
        %v297 = vld [vmem:[%s222 + $0x8] sm:$0xff]
        %v298 = vld [vmem:[%s222 + $0x10] sm:$0xff]
        %v299 = vld [vmem:[%s222 + $0x18] sm:$0xff]
        %v348 = vunpack.c.l.b16 %v224
        %v349 = vunpack.c.l.b16 %v225
        %v350 = vunpack.c.l.b16 %v226
        %v351 = vunpack.c.l.b16 %v227
        %v352 = vunpack.c.l.b16 %v228
        %v353 = vunpack.c.l.b16 %v229
        %v354 = vunpack.c.l.b16 %v230
        %v355 = vunpack.c.l.b16 %v231
        %v356 = vunpack.c.l.b16 %v232
        %v357 = vunpack.c.l.b16 %v233
        %v358 = vunpack.c.l.b16 %v234
        %v359 = vunpack.c.l.b16 %v235
        %v360 = vunpack.c.l.b16 %v236
        %v361 = vunpack.c.l.b16 %v237
        %v362 = vunpack.c.l.b16 %v238
        %v363 = vunpack.c.l.b16 %v239
        %v364 = vunpack.c.l.b16 %v240
        %v365 = vunpack.c.l.b16 %v241
        %v366 = vunpack.c.l.b16 %v242
        %v367 = vunpack.c.l.b16 %v243
        %v368 = vunpack.c.l.b16 %v244
        %v369 = vunpack.c.l.b16 %v245
        %v370 = vunpack.c.l.b16 %v246
        %v371 = vunpack.c.l.b16 %v247
        %v372 = vunpack.c.l.b16 %v248
        %v373 = vunpack.c.l.b16 %v249
        %v374 = vunpack.c.l.b16 %v250
        %v375 = vunpack.c.l.b16 %v251
        %v376 = vunpack.c.l.b16 %v252
        %v377 = vunpack.c.l.b16 %v253
        %v378 = vunpack.c.l.b16 %v254
        %v379 = vunpack.c.l.b16 %v255
        %v380 = vunpack.c.l.b16 %v256
        %v381 = vunpack.c.l.b16 %v257
        %v382 = vunpack.c.l.b16 %v258
        %v383 = vunpack.c.l.b16 %v259
        %v384 = vunpack.c.l.b16 %v260
        %v385 = vunpack.c.l.b16 %v261
        %v386 = vunpack.c.l.b16 %v262
        %v387 = vunpack.c.l.b16 %v263
        %v388 = vunpack.c.l.b16 %v264
        %v389 = vunpack.c.l.b16 %v265
        %v390 = vunpack.c.l.b16 %v266
        %v391 = vunpack.c.l.b16 %v267
        %v392 = vunpack.c.l.b16 %v268
        %v393 = vunpack.c.l.b16 %v269
        %v394 = vunpack.c.l.b16 %v270
        %v395 = vunpack.c.l.b16 %v271
        %v396 = vpack.c.b16 %v349, %v348
        %v397 = vpack.c.b16 %v351, %v350
        %v398 = vpack.c.b16 %v353, %v352
        %v399 = vpack.c.b16 %v355, %v354
        %v400 = vpack.c.b16 %v357, %v356
        %v401 = vpack.c.b16 %v359, %v358
        %v402 = vpack.c.b16 %v361, %v360
        %v403 = vpack.c.b16 %v363, %v362
        %v404 = vpack.c.b16 %v365, %v364
        %v405 = vpack.c.b16 %v367, %v366
        %v406 = vpack.c.b16 %v369, %v368
        %v407 = vpack.c.b16 %v371, %v370
        %v408 = vpack.c.b16 %v373, %v372
        %v409 = vpack.c.b16 %v375, %v374
        %v410 = vpack.c.b16 %v377, %v376
        %v411 = vpack.c.b16 %v379, %v378
        %v412 = vpack.c.b16 %v381, %v380
        %v413 = vpack.c.b16 %v383, %v382
        %v414 = vpack.c.b16 %v385, %v384
        %v415 = vpack.c.b16 %v387, %v386
        %v416 = vpack.c.b16 %v389, %v388
        %v417 = vpack.c.b16 %v391, %v390
        %v418 = vpack.c.b16 %v393, %v392
        %v419 = vpack.c.b16 %v395, %v394
        %v424 = vunpack.c.l.b16 %v296
        %v425 = vunpack.c.h.b16 %v296
        %v426 = vunpack.c.l.b16 %v297
        %v427 = vunpack.c.h.b16 %v297
        %v428 = vunpack.c.l.b16 %v298
        %v429 = vunpack.c.h.b16 %v298
        %v430 = vunpack.c.l.b16 %v299
        %v431 = vunpack.c.h.b16 %v299
        %v432 = vpack.c.b16 %v426, %v424
        %v433 = vpack.c.b16 %v427, %v425
        %v434 = vpack.c.b16 %v430, %v428
        %v435 = vpack.c.b16 %v431, %v429
        %vm440 = vcmask 261120
        %v442 = vsel %vm440, %v396, 0
        %v445 = vsel %vm440, %v397, 0
        %v448 = vsel %vm440, %v398, 0
        %v451 = vsel %vm440, %v399, 0
        %v454 = vsel %vm440, %v400, 0
        %v457 = vsel %vm440, %v401, 0
        %v460 = vsel %vm440, %v402, 0
        %v463 = vsel %vm440, %v403, 0
        %v466 = vsel %vm440, %v404, 0
        %v469 = vsel %vm440, %v405, 0
        %v472 = vsel %vm440, %v406, 0
        %v475 = vsel %vm440, %v407, 0
        %v478 = vsel %vm440, %v408, 0
        %v481 = vsel %vm440, %v409, 0
        %v484 = vsel %vm440, %v410, 0
        %v487 = vsel %vm440, %v411, 0
        %v490 = vsel %vm440, %v412, 0
        %v493 = vsel %vm440, %v413, 0
        %v496 = vsel %vm440, %v414, 0
        %v499 = vsel %vm440, %v415, 0
        %v502 = vsel %vm440, %v416, 0
        %v505 = vsel %vm440, %v417, 0
        %v508 = vsel %vm440, %v418, 0
        %v511 = vsel %vm440, %v419, 0
        %513 = vmatprep.subr.bf16.mxu0 %v433
        %514 = vmatpush1.bf16.msra.mxu0 %v432
        %515 = vmatprep.subr.bf16.mxu0 %v435
        %516 = vmatpush1.bf16.msra.mxu0 %v434
        %517 = vmatprep.subr.bf16.mxu0 0
        %518 = vmatpush1.bf16.msra.mxu0 0
        %519 = vmatprep.subr.bf16.mxu0 0
        %520 = vmatpush1.bf16.msra.mxu0 0
        %521 = vmatprep.subr.bf16.mxu0 0
        %522 = vmatpush1.bf16.msra.mxu0 0
        %523 = vmatprep.subr.bf16.mxu0 0
        %524 = vmatpush1.bf16.msra.mxu0 0
        %525 = vmatprep.subr.bf16.mxu0 0
        %526 = vmatpush1.bf16.msra.mxu0 0
        %527 = vmatprep.subr.bf16.mxu0 0
        %528 = vmatpush1.bf16.msra.mxu0 0
        %529 = vmatprep.subr.bf16.mxu0 0
        %530 = vmatpush1.bf16.msra.mxu0 0
        %531 = vmatprep.subr.bf16.mxu0 0
        %532 = vmatpush1.bf16.msra.mxu0 0
        %533 = vmatprep.subr.bf16.mxu0 0
        %534 = vmatpush1.bf16.msra.mxu0 0
        %535 = vmatprep.subr.bf16.mxu0 0
        %536 = vmatpush1.bf16.msra.mxu0 0
        %537 = vmatprep.subr.bf16.mxu0 0
        %538 = vmatpush1.bf16.msra.mxu0 0
        %539 = vmatprep.subr.bf16.mxu0 0
        %540 = vmatpush1.bf16.msra.mxu0 0
        %541 = vmatprep.subr.bf16.mxu0 0
        %542 = vmatpush1.bf16.msra.mxu0 0
        %543 = vmatprep.subr.bf16.mxu0 0
        %544 = vmatpush1.bf16.msra.mxu0 0
        %545 = vmatprep.mubr.bf16.mxu0 0
        %546 = vmatmul.mubr.bf16.gmra.mrb[0].mxu0 %v442
        %v547 = vpop.f32.mrb[0].mxu0
        %v548 = vadd.f32 0.0, %v547
        %v549 = vpop.f32.mrb[0].mxu0
        %v550 = vadd.f32 0.0, %v549
        %v551 = vpop.f32.mrb[0].mxu0
        %v552 = vadd.f32 0.0, %v551
        %v553 = vpop.f32.mrb[0].mxu0
        %v554 = vadd.f32 0.0, %v553
        %555 = vmatprep.mubr.bf16.mxu0 0
        %556 = vmatmul.mubr.bf16.gmra.mrb[0].mxu0 %v445
        %v557 = vpop.f32.mrb[0].mxu0
        %v558 = vadd.f32 0.0, %v557
        %v559 = vpop.f32.mrb[0].mxu0
        %v560 = vadd.f32 0.0, %v559
        %v561 = vpop.f32.mrb[0].mxu0
        %v562 = vadd.f32 0.0, %v561
        %v563 = vpop.f32.mrb[0].mxu0
        %v564 = vadd.f32 0.0, %v563
        %565 = vmatprep.mubr.bf16.mxu0 0
        %566 = vmatmul.mubr.bf16.gmra.mrb[0].mxu0 %v448
        %v567 = vpop.f32.mrb[0].mxu0
        %v568 = vadd.f32 0.0, %v567
        %v569 = vpop.f32.mrb[0].mxu0
        %v570 = vadd.f32 0.0, %v569
        %v571 = vpop.f32.mrb[0].mxu0
        %v572 = vadd.f32 0.0, %v571
        %v573 = vpop.f32.mrb[0].mxu0
        %v574 = vadd.f32 0.0, %v573
        %575 = vmatprep.mubr.bf16.mxu0 0
        %576 = vmatmul.mubr.bf16.gmra.mrb[0].mxu0 %v451
        %v577 = vpop.f32.mrb[0].mxu0
        %v578 = vadd.f32 0.0, %v577
        %v579 = vpop.f32.mrb[0].mxu0
        %v580 = vadd.f32 0.0, %v579
        %v581 = vpop.f32.mrb[0].mxu0
        %v582 = vadd.f32 0.0, %v581
        %v583 = vpop.f32.mrb[0].mxu0
        %v584 = vadd.f32 0.0, %v583
        %585 = vmatprep.mubr.bf16.mxu0 0
        %586 = vmatmul.mubr.bf16.gmra.mrb[0].mxu0 %v454
        %v587 = vpop.f32.mrb[0].mxu0
        %v588 = vadd.f32 0.0, %v587
        %v589 = vpop.f32.mrb[0].mxu0
        %v590 = vadd.f32 0.0, %v589
        %v591 = vpop.f32.mrb[0].mxu0
        %v592 = vadd.f32 0.0, %v591
        %v593 = vpop.f32.mrb[0].mxu0
        %v594 = vadd.f32 0.0, %v593
        %595 = vmatprep.mubr.bf16.mxu0 0
        %596 = vmatmul.mubr.bf16.gmra.mrb[0].mxu0 %v457
        %v597 = vpop.f32.mrb[0].mxu0
        %v598 = vadd.f32 0.0, %v597
        %v599 = vpop.f32.mrb[0].mxu0
        %v600 = vadd.f32 0.0, %v599
        %v601 = vpop.f32.mrb[0].mxu0
        %v602 = vadd.f32 0.0, %v601
        %v603 = vpop.f32.mrb[0].mxu0
        %v604 = vadd.f32 0.0, %v603
        %605 = vmatprep.mubr.bf16.mxu0 0
        %606 = vmatmul.mubr.bf16.gmra.mrb[0].mxu0 %v460
        %v607 = vpop.f32.mrb[0].mxu0
        %v608 = vadd.f32 0.0, %v607
        %v609 = vpop.f32.mrb[0].mxu0
        %v610 = vadd.f32 0.0, %v609
        %v611 = vpop.f32.mrb[0].mxu0
        %v612 = vadd.f32 0.0, %v611
        %v613 = vpop.f32.mrb[0].mxu0
        %v614 = vadd.f32 0.0, %v613
        %615 = vmatprep.mubr.bf16.mxu0 0
        %616 = vmatmul.mubr.bf16.gmra.mrb[0].mxu0 %v463
        %v617 = vpop.f32.mrb[0].mxu0
        %v618 = vadd.f32 0.0, %v617
        %v619 = vpop.f32.mrb[0].mxu0
        %v620 = vadd.f32 0.0, %v619
        %v621 = vpop.f32.mrb[0].mxu0
        %v622 = vadd.f32 0.0, %v621
        %v623 = vpop.f32.mrb[0].mxu0
        %v624 = vadd.f32 0.0, %v623
        %625 = vmatprep.mubr.bf16.mxu0 0
        %626 = vmatmul.mubr.bf16.gmra.mrb[0].mxu0 %v466
        %v627 = vpop.f32.mrb[0].mxu0
        %v628 = vadd.f32 0.0, %v627
        %v629 = vpop.f32.mrb[0].mxu0
        %v630 = vadd.f32 0.0, %v629
        %v631 = vpop.f32.mrb[0].mxu0
        %v632 = vadd.f32 0.0, %v631
        %v633 = vpop.f32.mrb[0].mxu0
        %v634 = vadd.f32 0.0, %v633
        %635 = vmatprep.mubr.bf16.mxu0 0
        %636 = vmatmul.mubr.bf16.gmra.mrb[0].mxu0 %v469
        %v637 = vpop.f32.mrb[0].mxu0
        %v638 = vadd.f32 0.0, %v637
        %v639 = vpop.f32.mrb[0].mxu0
        %v640 = vadd.f32 0.0, %v639
        %v641 = vpop.f32.mrb[0].mxu0
        %v642 = vadd.f32 0.0, %v641
        %v643 = vpop.f32.mrb[0].mxu0
        %v644 = vadd.f32 0.0, %v643
        %645 = vmatprep.mubr.bf16.mxu0 0
        %646 = vmatmul.mubr.bf16.gmra.mrb[0].mxu0 %v472
        %v647 = vpop.f32.mrb[0].mxu0
        %v648 = vadd.f32 0.0, %v647
        %v649 = vpop.f32.mrb[0].mxu0
        %v650 = vadd.f32 0.0, %v649
        %v651 = vpop.f32.mrb[0].mxu0
        %v652 = vadd.f32 0.0, %v651
        %v653 = vpop.f32.mrb[0].mxu0
        %v654 = vadd.f32 0.0, %v653
        %655 = vmatprep.mubr.bf16.mxu0 0
        %656 = vmatmul.mubr.bf16.gmra.mrb[0].mxu0 %v475
        %v657 = vpop.f32.mrb[0].mxu0
        %v658 = vadd.f32 0.0, %v657
        %v659 = vpop.f32.mrb[0].mxu0
        %v660 = vadd.f32 0.0, %v659
        %v661 = vpop.f32.mrb[0].mxu0
        %v662 = vadd.f32 0.0, %v661
        %v663 = vpop.f32.mrb[0].mxu0
        %v664 = vadd.f32 0.0, %v663
        %665 = vmatprep.mubr.bf16.mxu0 0
        %666 = vmatmul.mubr.bf16.gmra.mrb[0].mxu0 %v478
        %v667 = vpop.f32.mrb[0].mxu0
        %v668 = vadd.f32 0.0, %v667
        %v669 = vpop.f32.mrb[0].mxu0
        %v670 = vadd.f32 0.0, %v669
        %v671 = vpop.f32.mrb[0].mxu0
        %v672 = vadd.f32 0.0, %v671
        %v673 = vpop.f32.mrb[0].mxu0
        %v674 = vadd.f32 0.0, %v673
        %675 = vmatprep.mubr.bf16.mxu0 0
        %676 = vmatmul.mubr.bf16.gmra.mrb[0].mxu0 %v481
        %v677 = vpop.f32.mrb[0].mxu0
        %v678 = vadd.f32 0.0, %v677
        %v679 = vpop.f32.mrb[0].mxu0
        %v680 = vadd.f32 0.0, %v679
        %v681 = vpop.f32.mrb[0].mxu0
        %v682 = vadd.f32 0.0, %v681
        %v683 = vpop.f32.mrb[0].mxu0
        %v684 = vadd.f32 0.0, %v683
        %685 = vmatprep.mubr.bf16.mxu0 0
        %686 = vmatmul.mubr.bf16.gmra.mrb[0].mxu0 %v484
        %v687 = vpop.f32.mrb[0].mxu0
        %v688 = vadd.f32 0.0, %v687
        %v689 = vpop.f32.mrb[0].mxu0
        %v690 = vadd.f32 0.0, %v689
        %v691 = vpop.f32.mrb[0].mxu0
        %v692 = vadd.f32 0.0, %v691
        %v693 = vpop.f32.mrb[0].mxu0
        %v694 = vadd.f32 0.0, %v693
        %695 = vmatprep.mubr.bf16.mxu0 0
        %696 = vmatmul.mubr.bf16.gmra.mrb[0].mxu0 %v487
        %v697 = vpop.f32.mrb[0].mxu0
        %v698 = vadd.f32 0.0, %v697
        %v699 = vpop.f32.mrb[0].mxu0
        %v700 = vadd.f32 0.0, %v699
        %v701 = vpop.f32.mrb[0].mxu0
        %v702 = vadd.f32 0.0, %v701
        %v703 = vpop.f32.mrb[0].mxu0
        %v704 = vadd.f32 0.0, %v703
        %705 = vmatprep.mubr.bf16.mxu0 0
        %706 = vmatmul.mubr.bf16.gmra.mrb[0].mxu0 %v490
        %v707 = vpop.f32.mrb[0].mxu0
        %v708 = vadd.f32 0.0, %v707
        %v709 = vpop.f32.mrb[0].mxu0
        %v710 = vadd.f32 0.0, %v709
        %v711 = vpop.f32.mrb[0].mxu0
        %v712 = vadd.f32 0.0, %v711
        %v713 = vpop.f32.mrb[0].mxu0
        %v714 = vadd.f32 0.0, %v713
        %715 = vmatprep.mubr.bf16.mxu0 0
        %716 = vmatmul.mubr.bf16.gmra.mrb[0].mxu0 %v493
        %v717 = vpop.f32.mrb[0].mxu0
        %v718 = vadd.f32 0.0, %v717
        %v719 = vpop.f32.mrb[0].mxu0
        %v720 = vadd.f32 0.0, %v719
        %v721 = vpop.f32.mrb[0].mxu0
        %v722 = vadd.f32 0.0, %v721
        %v723 = vpop.f32.mrb[0].mxu0
        %v724 = vadd.f32 0.0, %v723
        %725 = vmatprep.mubr.bf16.mxu0 0
        %726 = vmatmul.mubr.bf16.gmra.mrb[0].mxu0 %v496
        %v727 = vpop.f32.mrb[0].mxu0
        %v728 = vadd.f32 0.0, %v727
        %v729 = vpop.f32.mrb[0].mxu0
        %v730 = vadd.f32 0.0, %v729
        %v731 = vpop.f32.mrb[0].mxu0
        %v732 = vadd.f32 0.0, %v731
        %v733 = vpop.f32.mrb[0].mxu0
        %v734 = vadd.f32 0.0, %v733
        %735 = vmatprep.mubr.bf16.mxu0 0
        %736 = vmatmul.mubr.bf16.gmra.mrb[0].mxu0 %v499
        %v737 = vpop.f32.mrb[0].mxu0
        %v738 = vadd.f32 0.0, %v737
        %v739 = vpop.f32.mrb[0].mxu0
        %v740 = vadd.f32 0.0, %v739
        %v741 = vpop.f32.mrb[0].mxu0
        %v742 = vadd.f32 0.0, %v741
        %v743 = vpop.f32.mrb[0].mxu0
        %v744 = vadd.f32 0.0, %v743
        %745 = vmatprep.mubr.bf16.mxu0 0
        %746 = vmatmul.mubr.bf16.gmra.mrb[0].mxu0 %v502
        %v747 = vpop.f32.mrb[0].mxu0
        %v748 = vadd.f32 0.0, %v747
        %v749 = vpop.f32.mrb[0].mxu0
        %v750 = vadd.f32 0.0, %v749
        %v751 = vpop.f32.mrb[0].mxu0
        %v752 = vadd.f32 0.0, %v751
        %v753 = vpop.f32.mrb[0].mxu0
        %v754 = vadd.f32 0.0, %v753
        %755 = vmatprep.mubr.bf16.mxu0 0
        %756 = vmatmul.mubr.bf16.gmra.mrb[0].mxu0 %v505
        %v757 = vpop.f32.mrb[0].mxu0
        %v758 = vadd.f32 0.0, %v757
        %v759 = vpop.f32.mrb[0].mxu0
        %v760 = vadd.f32 0.0, %v759
        %v761 = vpop.f32.mrb[0].mxu0
        %v762 = vadd.f32 0.0, %v761
        %v763 = vpop.f32.mrb[0].mxu0
        %v764 = vadd.f32 0.0, %v763
        %765 = vmatprep.mubr.bf16.mxu0 0
        %766 = vmatmul.mubr.bf16.gmra.mrb[0].mxu0 %v508
        %v767 = vpop.f32.mrb[0].mxu0
        %v768 = vadd.f32 0.0, %v767
        %v769 = vpop.f32.mrb[0].mxu0
        %v770 = vadd.f32 0.0, %v769
        %v771 = vpop.f32.mrb[0].mxu0
        %v772 = vadd.f32 0.0, %v771
        %v773 = vpop.f32.mrb[0].mxu0
        %v774 = vadd.f32 0.0, %v773
        %775 = vmatprep.mubr.bf16.mxu0 0
        %776 = vmatmul.mubr.bf16.gmra.mrb[0].mxu0 %v511
        %v777 = vpop.f32.mrb[0].mxu0
        %v778 = vadd.f32 0.0, %v777
        %v779 = vpop.f32.mrb[0].mxu0
        %v780 = vadd.f32 0.0, %v779
        %v781 = vpop.f32.mrb[0].mxu0
        %v782 = vadd.f32 0.0, %v781
        %v783 = vpop.f32.mrb[0].mxu0
        %v784 = vadd.f32 0.0, %v783
        %785 = vdwg.mxu0
        %v786 = vmax.f32 %v548, %v558
        %v787 = vmax.f32 %v552, %v562
        %v788 = vmax.f32 %v786, %v787
        %v789 = vrot.slane %v788, 4
        %v790 = vmax.f32 %v788, %v789
        %v791 = vrot.slane %v790, 2
        %v792 = vmax.f32 %v790, %v791
        %v793 = vrot.slane %v792, 1
        %v794 = vmax.f32 %v792, %v793
        %v795 = vmax.f32 %v550, %v560
        %v796 = vmax.f32 %v554, %v564
        %v797 = vmax.f32 %v795, %v796
        %v798 = vrot.slane %v797, 4
        %v799 = vmax.f32 %v797, %v798
        %v800 = vrot.slane %v799, 2
        %v801 = vmax.f32 %v799, %v800
        %v802 = vrot.slane %v801, 1
        %v803 = vmax.f32 %v801, %v802
        %v804 = vsub.f32 %v548, %v794
        %v805 = vsub.f32 %v550, %v803
        %v806 = vsub.f32 %v552, %v794
        %v807 = vsub.f32 %v554, %v803
        %v808 = vsub.f32 %v558, %v794
        %v809 = vsub.f32 %v560, %v803
        %v810 = vsub.f32 %v562, %v794
        %v811 = vsub.f32 %v564, %v803
        %v812 = vmul.f32 %v804, 1.442695
        %v813 = vpow.pop %v812
        %v814 = vmul.f32 %v805, 1.442695
        %v815 = vpow.pop %v814
        %v816 = vmul.f32 %v806, 1.442695
        %v817 = vpow.pop %v816
        %v818 = vmul.f32 %v807, 1.442695
        %v819 = vpow.pop %v818
        %v820 = vmul.f32 %v808, 1.442695
        %v821 = vpow.pop %v820
        %v822 = vmul.f32 %v809, 1.442695
        %v823 = vpow.pop %v822
        %v824 = vmul.f32 %v810, 1.442695
        %v825 = vpow.pop %v824
        %v826 = vmul.f32 %v811, 1.442695
        %v827 = vpow.pop %v826
        %v828 = vadd.f32 %v813, %v817
        %v829 = vadd.f32 %v828, %v821
        %v830 = vadd.f32 %v829, %v825
        %v831 = vrot.slane %v830, 4
        %v832 = vadd.f32 %v830, %v831
        %v833 = vrot.slane %v832, 2
        %v834 = vadd.f32 %v832, %v833
        %v835 = vrot.slane %v834, 1
        %v836 = vadd.f32 %v834, %v835
        %v837 = vadd.f32 %v815, %v819
        %v838 = vadd.f32 %v837, %v823
        %v839 = vadd.f32 %v838, %v827
        %v840 = vrot.slane %v839, 4
        %v841 = vadd.f32 %v839, %v840
        %v842 = vrot.slane %v841, 2
        %v843 = vadd.f32 %v841, %v842
        %v844 = vrot.slane %v843, 1
        %v845 = vadd.f32 %v843, %v844
        %v846 = vrcp.pop %v836
        %v847 = vrcp.pop %v845
        %v848 = vmul.f32 %v813, %v846
        %v849 = vmul.f32 %v815, %v847
        %v850 = vmul.f32 %v817, %v846
        %v851 = vmul.f32 %v819, %v847
        %v852 = vmul.f32 %v821, %v846
        %v853 = vmul.f32 %v823, %v847
        %v854 = vmul.f32 %v825, %v846
        %v855 = vmul.f32 %v827, %v847
        %v856 = vpack.c.bf16 %v850, %v848
        %v857 = vpack.c.bf16 %v851, %v849
        %v858 = vpack.c.bf16 %v854, %v852
        %v859 = vpack.c.bf16 %v855, %v853
        %860 = vst [vmem:[#allocation2] sm:$0xff] %v856
        %861 = vst [vmem:[#allocation2 + $0x8] sm:$0xff] %v857
        %862 = vst [vmem:[#allocation2 + $0x10] sm:$0xff] %v858
        %863 = vst [vmem:[#allocation2 + $0x18] sm:$0xff] %v859
        %v864 = vmax.f32 %v568, %v578
        %v865 = vmax.f32 %v572, %v582
        %v866 = vmax.f32 %v864, %v865
        %v867 = vrot.slane %v866, 4
        %v868 = vmax.f32 %v866, %v867
        %v869 = vrot.slane %v868, 2
        %v870 = vmax.f32 %v868, %v869
        %v871 = vrot.slane %v870, 1
        %v872 = vmax.f32 %v870, %v871
        %v873 = vmax.f32 %v570, %v580
        %v874 = vmax.f32 %v574, %v584
        %v875 = vmax.f32 %v873, %v874
        %v876 = vrot.slane %v875, 4
        %v877 = vmax.f32 %v875, %v876
        %v878 = vrot.slane %v877, 2
        %v879 = vmax.f32 %v877, %v878
        %v880 = vrot.slane %v879, 1
        %v881 = vmax.f32 %v879, %v880
        %v882 = vsub.f32 %v568, %v872
        %v883 = vsub.f32 %v570, %v881
        %v884 = vsub.f32 %v572, %v872
        %v885 = vsub.f32 %v574, %v881
        %v886 = vsub.f32 %v578, %v872
        %v887 = vsub.f32 %v580, %v881
        %v888 = vsub.f32 %v582, %v872
        %v889 = vsub.f32 %v584, %v881
        %v890 = vmul.f32 %v882, 1.442695
        %v891 = vpow.pop %v890
        %v892 = vmul.f32 %v883, 1.442695
        %v893 = vpow.pop %v892
        %v894 = vmul.f32 %v884, 1.442695
        %v895 = vpow.pop %v894
        %v896 = vmul.f32 %v885, 1.442695
        %v897 = vpow.pop %v896
        %v898 = vmul.f32 %v886, 1.442695
        %v899 = vpow.pop %v898
        %v900 = vmul.f32 %v887, 1.442695
        %v901 = vpow.pop %v900
        %v902 = vmul.f32 %v888, 1.442695
        %v903 = vpow.pop %v902
        %v904 = vmul.f32 %v889, 1.442695
        %v905 = vpow.pop %v904
        %v906 = vadd.f32 %v891, %v895
        %v907 = vadd.f32 %v906, %v899
        %v908 = vadd.f32 %v907, %v903
        %v909 = vrot.slane %v908, 4
        %v910 = vadd.f32 %v908, %v909
        %v911 = vrot.slane %v910, 2
        %v912 = vadd.f32 %v910, %v911
        %v913 = vrot.slane %v912, 1
        %v914 = vadd.f32 %v912, %v913
        %v915 = vadd.f32 %v893, %v897
        %v916 = vadd.f32 %v915, %v901
        %v917 = vadd.f32 %v916, %v905
        %v918 = vrot.slane %v917, 4
        %v919 = vadd.f32 %v917, %v918
        %v920 = vrot.slane %v919, 2
        %v921 = vadd.f32 %v919, %v920
        %v922 = vrot.slane %v921, 1
        %v923 = vadd.f32 %v921, %v922
        %v924 = vrcp.pop %v914
        %v925 = vrcp.pop %v923
        %v926 = vmul.f32 %v891, %v924
        %v927 = vmul.f32 %v893, %v925
        %v928 = vmul.f32 %v895, %v924
        %v929 = vmul.f32 %v897, %v925
        %v930 = vmul.f32 %v899, %v924
        %v931 = vmul.f32 %v901, %v925
        %v932 = vmul.f32 %v903, %v924
        %v933 = vmul.f32 %v905, %v925
        %v934 = vpack.c.bf16 %v928, %v926
        %v935 = vpack.c.bf16 %v929, %v927
        %v936 = vpack.c.bf16 %v932, %v930
        %v937 = vpack.c.bf16 %v933, %v931
        %938 = vst [vmem:[#allocation2 + $0x20] sm:$0xff] %v934
        %939 = vst [vmem:[#allocation2 + $0x28] sm:$0xff] %v935
        %940 = vst [vmem:[#allocation2 + $0x30] sm:$0xff] %v936
        %941 = vst [vmem:[#allocation2 + $0x38] sm:$0xff] %v937
        %v942 = vmax.f32 %v588, %v598
        %v943 = vmax.f32 %v592, %v602
        %v944 = vmax.f32 %v942, %v943
        %v945 = vrot.slane %v944, 4
        %v946 = vmax.f32 %v944, %v945
        %v947 = vrot.slane %v946, 2
        %v948 = vmax.f32 %v946, %v947
        %v949 = vrot.slane %v948, 1
        %v950 = vmax.f32 %v948, %v949
        %v951 = vmax.f32 %v590, %v600
        %v952 = vmax.f32 %v594, %v604
        %v953 = vmax.f32 %v951, %v952
        %v954 = vrot.slane %v953, 4
        %v955 = vmax.f32 %v953, %v954
        %v956 = vrot.slane %v955, 2
        %v957 = vmax.f32 %v955, %v956
        %v958 = vrot.slane %v957, 1
        %v959 = vmax.f32 %v957, %v958
        %v960 = vsub.f32 %v588, %v950
        %v961 = vsub.f32 %v590, %v959
        %v962 = vsub.f32 %v592, %v950
        %v963 = vsub.f32 %v594, %v959
        %v964 = vsub.f32 %v598, %v950
        %v965 = vsub.f32 %v600, %v959
        %v966 = vsub.f32 %v602, %v950
        %v967 = vsub.f32 %v604, %v959
        %v968 = vmul.f32 %v960, 1.442695
        %v969 = vpow.pop %v968
        %v970 = vmul.f32 %v961, 1.442695
        %v971 = vpow.pop %v970
        %v972 = vmul.f32 %v962, 1.442695
        %v973 = vpow.pop %v972
        %v974 = vmul.f32 %v963, 1.442695
        %v975 = vpow.pop %v974
        %v976 = vmul.f32 %v964, 1.442695
        %v977 = vpow.pop %v976
        %v978 = vmul.f32 %v965, 1.442695
        %v979 = vpow.pop %v978
        %v980 = vmul.f32 %v966, 1.442695
        %v981 = vpow.pop %v980
        %v982 = vmul.f32 %v967, 1.442695
        %v983 = vpow.pop %v982
        %v984 = vadd.f32 %v969, %v973
        %v985 = vadd.f32 %v984, %v977
        %v986 = vadd.f32 %v985, %v981
        %v987 = vrot.slane %v986, 4
        %v988 = vadd.f32 %v986, %v987
        %v989 = vrot.slane %v988, 2
        %v990 = vadd.f32 %v988, %v989
        %v991 = vrot.slane %v990, 1
        %v992 = vadd.f32 %v990, %v991
        %v993 = vadd.f32 %v971, %v975
        %v994 = vadd.f32 %v993, %v979
        %v995 = vadd.f32 %v994, %v983
        %v996 = vrot.slane %v995, 4
        %v997 = vadd.f32 %v995, %v996
        %v998 = vrot.slane %v997, 2
        %v999 = vadd.f32 %v997, %v998
        %v1000 = vrot.slane %v999, 1
        %v1001 = vadd.f32 %v999, %v1000
        %v1002 = vrcp.pop %v992
        %v1003 = vrcp.pop %v1001
        %v1004 = vmul.f32 %v969, %v1002
        %v1005 = vmul.f32 %v971, %v1003
        %v1006 = vmul.f32 %v973, %v1002
        %v1007 = vmul.f32 %v975, %v1003
        %v1008 = vmul.f32 %v977, %v1002
        %v1009 = vmul.f32 %v979, %v1003
        %v1010 = vmul.f32 %v981, %v1002
        %v1011 = vmul.f32 %v983, %v1003
        %v1012 = vpack.c.bf16 %v1006, %v1004
        %v1013 = vpack.c.bf16 %v1007, %v1005
        %v1014 = vpack.c.bf16 %v1010, %v1008
        %v1015 = vpack.c.bf16 %v1011, %v1009
        %1016 = vst [vmem:[#allocation2 + $0x40] sm:$0xff] %v1012
        %1017 = vst [vmem:[#allocation2 + $0x48] sm:$0xff] %v1013
        %1018 = vst [vmem:[#allocation2 + $0x50] sm:$0xff] %v1014
        %1019 = vst [vmem:[#allocation2 + $0x58] sm:$0xff] %v1015
        %v1020 = vmax.f32 %v608, %v618
        %v1021 = vmax.f32 %v612, %v622
        %v1022 = vmax.f32 %v1020, %v1021
        %v1023 = vrot.slane %v1022, 4
        %v1024 = vmax.f32 %v1022, %v1023
        %v1025 = vrot.slane %v1024, 2
        %v1026 = vmax.f32 %v1024, %v1025
        %v1027 = vrot.slane %v1026, 1
        %v1028 = vmax.f32 %v1026, %v1027
        %v1029 = vmax.f32 %v610, %v620
        %v1030 = vmax.f32 %v614, %v624
        %v1031 = vmax.f32 %v1029, %v1030
        %v1032 = vrot.slane %v1031, 4
        %v1033 = vmax.f32 %v1031, %v1032
        %v1034 = vrot.slane %v1033, 2
        %v1035 = vmax.f32 %v1033, %v1034
        %v1036 = vrot.slane %v1035, 1
        %v1037 = vmax.f32 %v1035, %v1036
        %v1038 = vsub.f32 %v608, %v1028
        %v1039 = vsub.f32 %v610, %v1037
        %v1040 = vsub.f32 %v612, %v1028
        %v1041 = vsub.f32 %v614, %v1037
        %v1042 = vsub.f32 %v618, %v1028
        %v1043 = vsub.f32 %v620, %v1037
        %v1044 = vsub.f32 %v622, %v1028
        %v1045 = vsub.f32 %v624, %v1037
        %v1046 = vmul.f32 %v1038, 1.442695
        %v1047 = vpow.pop %v1046
        %v1048 = vmul.f32 %v1039, 1.442695
        %v1049 = vpow.pop %v1048
        %v1050 = vmul.f32 %v1040, 1.442695
        %v1051 = vpow.pop %v1050
        %v1052 = vmul.f32 %v1041, 1.442695
        %v1053 = vpow.pop %v1052
        %v1054 = vmul.f32 %v1042, 1.442695
        %v1055 = vpow.pop %v1054
        %v1056 = vmul.f32 %v1043, 1.442695
        %v1057 = vpow.pop %v1056
        %v1058 = vmul.f32 %v1044, 1.442695
        %v1059 = vpow.pop %v1058
        %v1060 = vmul.f32 %v1045, 1.442695
        %v1061 = vpow.pop %v1060
        %v1062 = vadd.f32 %v1047, %v1051
        %v1063 = vadd.f32 %v1062, %v1055
        %v1064 = vadd.f32 %v1063, %v1059
        %v1065 = vrot.slane %v1064, 4
        %v1066 = vadd.f32 %v1064, %v1065
        %v1067 = vrot.slane %v1066, 2
        %v1068 = vadd.f32 %v1066, %v1067
        %v1069 = vrot.slane %v1068, 1
        %v1070 = vadd.f32 %v1068, %v1069
        %v1071 = vadd.f32 %v1049, %v1053
        %v1072 = vadd.f32 %v1071, %v1057
        %v1073 = vadd.f32 %v1072, %v1061
        %v1074 = vrot.slane %v1073, 4
        %v1075 = vadd.f32 %v1073, %v1074
        %v1076 = vrot.slane %v1075, 2
        %v1077 = vadd.f32 %v1075, %v1076
        %v1078 = vrot.slane %v1077, 1
        %v1079 = vadd.f32 %v1077, %v1078
        %v1080 = vrcp.pop %v1070
        %v1081 = vrcp.pop %v1079
        %v1082 = vmul.f32 %v1047, %v1080
        %v1083 = vmul.f32 %v1049, %v1081
        %v1084 = vmul.f32 %v1051, %v1080
        %v1085 = vmul.f32 %v1053, %v1081
        %v1086 = vmul.f32 %v1055, %v1080
        %v1087 = vmul.f32 %v1057, %v1081
        %v1088 = vmul.f32 %v1059, %v1080
        %v1089 = vmul.f32 %v1061, %v1081
        %v1090 = vpack.c.bf16 %v1084, %v1082
        %v1091 = vpack.c.bf16 %v1085, %v1083
        %v1092 = vpack.c.bf16 %v1088, %v1086
        %v1093 = vpack.c.bf16 %v1089, %v1087
        %1094 = vst [vmem:[#allocation2 + $0x60] sm:$0xff] %v1090
        %1095 = vst [vmem:[#allocation2 + $0x68] sm:$0xff] %v1091
        %1096 = vst [vmem:[#allocation2 + $0x70] sm:$0xff] %v1092
        %1097 = vst [vmem:[#allocation2 + $0x78] sm:$0xff] %v1093
        %v1098 = vmax.f32 %v628, %v630
        %1099 = vmax.xlane.f32.xlu0 %v1098
        %v1100 = vpop.xlane.xlu0 %1099
        %v1101 = vmax.f32 %v632, %v634
        %1102 = vmax.xlane.f32.xlu0 %v1101
        %v1103 = vpop.xlane.xlu0 %1102
        %v1104 = vmax.f32 %v638, %v640
        %1105 = vmax.xlane.f32.xlu0 %v1104
        %v1106 = vpop.xlane.xlu0 %1105
        %v1107 = vmax.f32 %v642, %v644
        %1108 = vmax.xlane.f32.xlu0 %v1107
        %v1109 = vpop.xlane.xlu0 %1108
        %v1110 = vmax.f32 %v648, %v650
        %1111 = vmax.xlane.f32.xlu0 %v1110
        %v1112 = vpop.xlane.xlu0 %1111
        %v1113 = vmax.f32 %v652, %v654
        %1114 = vmax.xlane.f32.xlu0 %v1113
        %v1115 = vpop.xlane.xlu0 %1114
        %v1116 = vmax.f32 %v658, %v660
        %1117 = vmax.xlane.f32.xlu0 %v1116
        %v1118 = vpop.xlane.xlu0 %1117
        %v1119 = vmax.f32 %v662, %v664
        %1120 = vmax.xlane.f32.xlu0 %v1119
        %v1121 = vpop.xlane.xlu0 %1120
        %v1122 = vmax.f32 %v668, %v670
        %1123 = vmax.xlane.f32.xlu0 %v1122
        %v1124 = vpop.xlane.xlu0 %1123
        %v1125 = vmax.f32 %v672, %v674
        %1126 = vmax.xlane.f32.xlu0 %v1125
        %v1127 = vpop.xlane.xlu0 %1126
        %v1128 = vmax.f32 %v678, %v680
        %1129 = vmax.xlane.f32.xlu0 %v1128
        %v1130 = vpop.xlane.xlu0 %1129
        %v1131 = vmax.f32 %v682, %v684
        %1132 = vmax.xlane.f32.xlu0 %v1131
        %v1133 = vpop.xlane.xlu0 %1132
        %v1134 = vmax.f32 %v688, %v690
        %1135 = vmax.xlane.f32.xlu0 %v1134
        %v1136 = vpop.xlane.xlu0 %1135
        %v1137 = vmax.f32 %v692, %v694
        %1138 = vmax.xlane.f32.xlu0 %v1137
        %v1139 = vpop.xlane.xlu0 %1138
        %v1140 = vmax.f32 %v698, %v700
        %1141 = vmax.xlane.f32.xlu0 %v1140
        %v1142 = vpop.xlane.xlu0 %1141
        %v1143 = vmax.f32 %v702, %v704
        %1144 = vmax.xlane.f32.xlu0 %v1143
        %v1145 = vpop.xlane.xlu0 %1144
        %v1146 = vsub.f32 %v628, %v1100
        %v1147 = vsub.f32 %v630, %v1100
        %v1148 = vsub.f32 %v632, %v1103
        %v1149 = vsub.f32 %v634, %v1103
        %v1150 = vsub.f32 %v638, %v1106
        %v1151 = vsub.f32 %v640, %v1106
        %v1152 = vsub.f32 %v642, %v1109
        %v1153 = vsub.f32 %v644, %v1109
        %v1154 = vsub.f32 %v648, %v1112
        %v1155 = vsub.f32 %v650, %v1112
        %v1156 = vsub.f32 %v652, %v1115
        %v1157 = vsub.f32 %v654, %v1115
        %v1158 = vsub.f32 %v658, %v1118
        %v1159 = vsub.f32 %v660, %v1118
        %v1160 = vsub.f32 %v662, %v1121
        %v1161 = vsub.f32 %v664, %v1121
        %v1162 = vsub.f32 %v668, %v1124
        %v1163 = vsub.f32 %v670, %v1124
        %v1164 = vsub.f32 %v672, %v1127
        %v1165 = vsub.f32 %v674, %v1127
        %v1166 = vsub.f32 %v678, %v1130
        %v1167 = vsub.f32 %v680, %v1130
        %v1168 = vsub.f32 %v682, %v1133
        %v1169 = vsub.f32 %v684, %v1133
        %v1170 = vsub.f32 %v688, %v1136
        %v1171 = vsub.f32 %v690, %v1136
        %v1172 = vsub.f32 %v692, %v1139
        %v1173 = vsub.f32 %v694, %v1139
        %v1174 = vsub.f32 %v698, %v1142
        %v1175 = vsub.f32 %v700, %v1142
        %v1176 = vsub.f32 %v702, %v1145
        %v1177 = vsub.f32 %v704, %v1145
        %v1178 = vmul.f32 %v1146, 1.442695
        %v1179 = vpow.pop %v1178
        %v1180 = vmul.f32 %v1147, 1.442695
        %v1181 = vpow.pop %v1180
        %v1182 = vmul.f32 %v1148, 1.442695
        %v1183 = vpow.pop %v1182
        %v1184 = vmul.f32 %v1149, 1.442695
        %v1185 = vpow.pop %v1184
        %v1186 = vmul.f32 %v1150, 1.442695
        %v1187 = vpow.pop %v1186
        %v1188 = vmul.f32 %v1151, 1.442695
        %v1189 = vpow.pop %v1188
        %v1190 = vmul.f32 %v1152, 1.442695
        %v1191 = vpow.pop %v1190
        %v1192 = vmul.f32 %v1153, 1.442695
        %v1193 = vpow.pop %v1192
        %v1194 = vmul.f32 %v1154, 1.442695
        %v1195 = vpow.pop %v1194
        %v1196 = vmul.f32 %v1155, 1.442695
        %v1197 = vpow.pop %v1196
        %v1198 = vmul.f32 %v1156, 1.442695
        %v1199 = vpow.pop %v1198
        %v1200 = vmul.f32 %v1157, 1.442695
        %v1201 = vpow.pop %v1200
        %v1202 = vmul.f32 %v1158, 1.442695
        %v1203 = vpow.pop %v1202
        %v1204 = vmul.f32 %v1159, 1.442695
        %v1205 = vpow.pop %v1204
        %v1206 = vmul.f32 %v1160, 1.442695
        %v1207 = vpow.pop %v1206
        %v1208 = vmul.f32 %v1161, 1.442695
        %v1209 = vpow.pop %v1208
        %v1210 = vmul.f32 %v1162, 1.442695
        %v1211 = vpow.pop %v1210
        %v1212 = vmul.f32 %v1163, 1.442695
        %v1213 = vpow.pop %v1212
        %v1214 = vmul.f32 %v1164, 1.442695
        %v1215 = vpow.pop %v1214
        %v1216 = vmul.f32 %v1165, 1.442695
        %v1217 = vpow.pop %v1216
        %v1218 = vmul.f32 %v1166, 1.442695
        %v1219 = vpow.pop %v1218
        %v1220 = vmul.f32 %v1167, 1.442695
        %v1221 = vpow.pop %v1220
        %v1222 = vmul.f32 %v1168, 1.442695
        %v1223 = vpow.pop %v1222
        %v1224 = vmul.f32 %v1169, 1.442695
        %v1225 = vpow.pop %v1224
        %v1226 = vmul.f32 %v1170, 1.442695
        %v1227 = vpow.pop %v1226
        %v1228 = vmul.f32 %v1171, 1.442695
        %v1229 = vpow.pop %v1228
        %v1230 = vmul.f32 %v1172, 1.442695
        %v1231 = vpow.pop %v1230
        %v1232 = vmul.f32 %v1173, 1.442695
        %v1233 = vpow.pop %v1232
        %v1234 = vmul.f32 %v1174, 1.442695
        %v1235 = vpow.pop %v1234
        %v1236 = vmul.f32 %v1175, 1.442695
        %v1237 = vpow.pop %v1236
        %v1238 = vmul.f32 %v1176, 1.442695
        %v1239 = vpow.pop %v1238
        %v1240 = vmul.f32 %v1177, 1.442695
        %v1241 = vpow.pop %v1240
        %v1242 = vadd.f32 %v1179, %v1181
        %1243 = vadd.xlane.f32.xlu0 %v1242
        %v1244 = vpop.xlane.xlu0 %1243
        %v1245 = vadd.f32 %v1183, %v1185
        %1246 = vadd.xlane.f32.xlu0 %v1245
        %v1247 = vpop.xlane.xlu0 %1246
        %v1248 = vadd.f32 %v1187, %v1189
        %1249 = vadd.xlane.f32.xlu0 %v1248
        %v1250 = vpop.xlane.xlu0 %1249
        %v1251 = vadd.f32 %v1191, %v1193
        %1252 = vadd.xlane.f32.xlu0 %v1251
        %v1253 = vpop.xlane.xlu0 %1252
        %v1254 = vadd.f32 %v1195, %v1197
        %1255 = vadd.xlane.f32.xlu0 %v1254
        %v1256 = vpop.xlane.xlu0 %1255
        %v1257 = vadd.f32 %v1199, %v1201
        %1258 = vadd.xlane.f32.xlu0 %v1257
        %v1259 = vpop.xlane.xlu0 %1258
        %v1260 = vadd.f32 %v1203, %v1205
        %1261 = vadd.xlane.f32.xlu0 %v1260
        %v1262 = vpop.xlane.xlu0 %1261
        %v1263 = vadd.f32 %v1207, %v1209
        %1264 = vadd.xlane.f32.xlu0 %v1263
        %v1265 = vpop.xlane.xlu0 %1264
        %v1266 = vadd.f32 %v1211, %v1213
        %1267 = vadd.xlane.f32.xlu0 %v1266
        %v1268 = vpop.xlane.xlu0 %1267
        %v1269 = vadd.f32 %v1215, %v1217
        %1270 = vadd.xlane.f32.xlu0 %v1269
        %v1271 = vpop.xlane.xlu0 %1270
        %v1272 = vadd.f32 %v1219, %v1221
        %1273 = vadd.xlane.f32.xlu0 %v1272
        %v1274 = vpop.xlane.xlu0 %1273
        %v1275 = vadd.f32 %v1223, %v1225
        %1276 = vadd.xlane.f32.xlu0 %v1275
        %v1277 = vpop.xlane.xlu0 %1276
        %v1278 = vadd.f32 %v1227, %v1229
        %1279 = vadd.xlane.f32.xlu0 %v1278
        %v1280 = vpop.xlane.xlu0 %1279
        %v1281 = vadd.f32 %v1231, %v1233
        %1282 = vadd.xlane.f32.xlu0 %v1281
        %v1283 = vpop.xlane.xlu0 %1282
        %v1284 = vadd.f32 %v1235, %v1237
        %1285 = vadd.xlane.f32.xlu0 %v1284
        %v1286 = vpop.xlane.xlu0 %1285
        %v1287 = vadd.f32 %v1239, %v1241
        %1288 = vadd.xlane.f32.xlu0 %v1287
        %v1289 = vpop.xlane.xlu0 %1288
        %v1290 = vrcp.pop %v1244
        %v1291 = vrcp.pop %v1247
        %v1292 = vrcp.pop %v1250
        %v1293 = vrcp.pop %v1253
        %v1294 = vrcp.pop %v1256
        %v1295 = vrcp.pop %v1259
        %v1296 = vrcp.pop %v1262
        %v1297 = vrcp.pop %v1265
        %v1298 = vrcp.pop %v1268
        %v1299 = vrcp.pop %v1271
        %v1300 = vrcp.pop %v1274
        %v1301 = vrcp.pop %v1277
        %v1302 = vrcp.pop %v1280
        %v1303 = vrcp.pop %v1283
        %v1304 = vrcp.pop %v1286
        %v1305 = vrcp.pop %v1289
        %v1306 = vmul.f32 %v1179, %v1290
        %v1307 = vmul.f32 %v1181, %v1290
        %v1308 = vmul.f32 %v1183, %v1291
        %v1309 = vmul.f32 %v1185, %v1291
        %v1310 = vmul.f32 %v1187, %v1292
        %v1311 = vmul.f32 %v1189, %v1292
        %v1312 = vmul.f32 %v1191, %v1293
        %v1313 = vmul.f32 %v1193, %v1293
        %v1314 = vmul.f32 %v1195, %v1294
        %v1315 = vmul.f32 %v1197, %v1294
        %v1316 = vmul.f32 %v1199, %v1295
        %v1317 = vmul.f32 %v1201, %v1295
        %v1318 = vmul.f32 %v1203, %v1296
        %v1319 = vmul.f32 %v1205, %v1296
        %v1320 = vmul.f32 %v1207, %v1297
        %v1321 = vmul.f32 %v1209, %v1297
        %v1322 = vmul.f32 %v1211, %v1298
        %v1323 = vmul.f32 %v1213, %v1298
        %v1324 = vmul.f32 %v1215, %v1299
        %v1325 = vmul.f32 %v1217, %v1299
        %v1326 = vmul.f32 %v1219, %v1300
        %v1327 = vmul.f32 %v1221, %v1300
        %v1328 = vmul.f32 %v1223, %v1301
        %v1329 = vmul.f32 %v1225, %v1301
        %v1330 = vmul.f32 %v1227, %v1302
        %v1331 = vmul.f32 %v1229, %v1302
        %v1332 = vmul.f32 %v1231, %v1303
        %v1333 = vmul.f32 %v1233, %v1303
        %v1334 = vmul.f32 %v1235, %v1304
        %v1335 = vmul.f32 %v1237, %v1304
        %v1336 = vmul.f32 %v1239, %v1305
        %v1337 = vmul.f32 %v1241, %v1305
        %v1338 = vpack.c.bf16 %v712, %v708
        %v1339 = vpack.c.bf16 %v714, %v710
        %v1340 = vpack.c.bf16 %v722, %v718
        %v1341 = vpack.c.bf16 %v724, %v720
        %v1342 = vpack.c.bf16 %v732, %v728
        %v1343 = vpack.c.bf16 %v734, %v730
        %v1344 = vpack.c.bf16 %v742, %v738
        %v1345 = vpack.c.bf16 %v744, %v740
        %v1346 = vpack.c.bf16 %v752, %v748
        %v1347 = vpack.c.bf16 %v754, %v750
        %v1348 = vpack.c.bf16 %v762, %v758
        %v1349 = vpack.c.bf16 %v764, %v760
        %v1350 = vpack.c.bf16 %v772, %v768
        %v1351 = vpack.c.bf16 %v774, %v770
        %v1352 = vpack.c.bf16 %v782, %v778
        %v1353 = vpack.c.bf16 %v784, %v780
        %v1354 = vpack.c.bf16 %v1308, %v1306
        %v1355 = vpack.c.bf16 %v1309, %v1307
        %v1356 = vpack.c.bf16 %v1312, %v1310
        %v1357 = vpack.c.bf16 %v1313, %v1311
        %v1358 = vpack.c.bf16 %v1316, %v1314
        %v1359 = vpack.c.bf16 %v1317, %v1315
        %v1360 = vpack.c.bf16 %v1320, %v1318
        %v1361 = vpack.c.bf16 %v1321, %v1319
        %v1362 = vpack.c.bf16 %v1324, %v1322
        %v1363 = vpack.c.bf16 %v1325, %v1323
        %v1364 = vpack.c.bf16 %v1328, %v1326
        %v1365 = vpack.c.bf16 %v1329, %v1327
        %v1366 = vpack.c.bf16 %v1332, %v1330
        %v1367 = vpack.c.bf16 %v1333, %v1331
        %v1368 = vpack.c.bf16 %v1336, %v1334
        %v1369 = vpack.c.bf16 %v1337, %v1335
        %1370 = vmatprep.subr.bf16.mxu0 %v1355
        %1371 = vmatpush1.bf16.xpose.msra.mxu0 %v1354
        %1372 = vmatprep.subr.bf16.mxu0 %v1357
        %1373 = vmatpush1.bf16.xpose.msra.mxu0 %v1356
        %1374 = vmatprep.subr.bf16.mxu0 %v1359
        %1375 = vmatpush1.bf16.xpose.msra.mxu0 %v1358
        %1376 = vmatprep.subr.bf16.mxu0 %v1361
        %1377 = vmatpush1.bf16.xpose.msra.mxu0 %v1360
        %1378 = vmatprep.subr.bf16.mxu0 %v1363
        %1379 = vmatpush1.bf16.xpose.msra.mxu0 %v1362
        %1380 = vmatprep.subr.bf16.mxu0 %v1365
        %1381 = vmatpush1.bf16.xpose.msra.mxu0 %v1364
        %1382 = vmatprep.subr.bf16.mxu0 %v1367
        %1383 = vmatpush1.bf16.xpose.msra.mxu0 %v1366
        %1384 = vmatprep.subr.bf16.mxu0 %v1369
        %1385 = vmatpush1.bf16.xpose.msra.mxu0 %v1368
        %1386 = vmatprep.subr.bf16.mxu0 0
        %1387 = vmatpush1.bf16.xpose.msra.mxu0 0
        %1388 = vmatprep.subr.bf16.mxu0 0
        %1389 = vmatpush1.bf16.xpose.msra.mxu0 0
        %1390 = vmatprep.subr.bf16.mxu0 0
        %1391 = vmatpush1.bf16.xpose.msra.mxu0 0
        %1392 = vmatprep.subr.bf16.mxu0 0
        %1393 = vmatpush1.bf16.xpose.msra.mxu0 0
        %1394 = vmatprep.subr.bf16.mxu0 0
        %1395 = vmatpush1.bf16.xpose.msra.mxu0 0
        %1396 = vmatprep.subr.bf16.mxu0 0
        %1397 = vmatpush1.bf16.xpose.msra.mxu0 0
        %1398 = vmatprep.subr.bf16.mxu0 0
        %1399 = vmatpush1.bf16.xpose.msra.mxu0 0
        %1400 = vmatprep.subr.bf16.mxu0 0
        %1401 = vmatpush1.bf16.xpose.msra.mxu0 0
        %1402 = vmatprep.mubr.bf16.mxu0 %v1339
        %1403 = vmatmul.mubr.bf16.gmra.mrb[0].mxu0 %v1338
        %v1404 = vpop.f32.mrb[0].mxu0
        %v1405 = vadd.f32 0.0, %v1404
        %v1406 = vpop.f32.mrb[0].mxu0
        %v1407 = vpop.f32.mrb[0].mxu0
        %v1408 = vadd.f32 0.0, %v1407
        %v1409 = vpop.f32.mrb[0].mxu0
        %1410 = vmatprep.mubr.bf16.mxu0 %v1341
        %1411 = vmatmul.mubr.bf16.gmra.mrb[0].mxu0 %v1340
        %v1412 = vpop.f32.mrb[0].mxu0
        %v1413 = vadd.f32 0.0, %v1412
        %v1414 = vpop.f32.mrb[0].mxu0
        %v1415 = vpop.f32.mrb[0].mxu0
        %v1416 = vadd.f32 0.0, %v1415
        %v1417 = vpop.f32.mrb[0].mxu0
        %1418 = vmatprep.mubr.bf16.mxu0 %v1343
        %1419 = vmatmul.mubr.bf16.gmra.mrb[0].mxu0 %v1342
        %v1420 = vpop.f32.mrb[0].mxu0
        %v1421 = vadd.f32 0.0, %v1420
        %v1422 = vpop.f32.mrb[0].mxu0
        %v1423 = vpop.f32.mrb[0].mxu0
        %v1424 = vadd.f32 0.0, %v1423
        %v1425 = vpop.f32.mrb[0].mxu0
        %1426 = vmatprep.mubr.bf16.mxu0 %v1345
        %1427 = vmatmul.mubr.bf16.gmra.mrb[0].mxu0 %v1344
        %v1428 = vpop.f32.mrb[0].mxu0
        %v1429 = vadd.f32 0.0, %v1428
        %v1430 = vpop.f32.mrb[0].mxu0
        %v1431 = vpop.f32.mrb[0].mxu0
        %v1432 = vadd.f32 0.0, %v1431
        %v1433 = vpop.f32.mrb[0].mxu0
        %1434 = vmatprep.mubr.bf16.mxu0 %v1347
        %1435 = vmatmul.mubr.bf16.gmra.mrb[0].mxu0 %v1346
        %v1436 = vpop.f32.mrb[0].mxu0
        %v1437 = vadd.f32 0.0, %v1436
        %v1438 = vpop.f32.mrb[0].mxu0
        %v1439 = vpop.f32.mrb[0].mxu0
        %v1440 = vadd.f32 0.0, %v1439
        %v1441 = vpop.f32.mrb[0].mxu0
        %1442 = vmatprep.mubr.bf16.mxu0 %v1349
        %1443 = vmatmul.mubr.bf16.gmra.mrb[0].mxu0 %v1348
        %v1444 = vpop.f32.mrb[0].mxu0
        %v1445 = vadd.f32 0.0, %v1444
        %v1446 = vpop.f32.mrb[0].mxu0
        %v1447 = vpop.f32.mrb[0].mxu0
        %v1448 = vadd.f32 0.0, %v1447
        %v1449 = vpop.f32.mrb[0].mxu0
        %1450 = vmatprep.mubr.bf16.mxu0 %v1351
        %1451 = vmatmul.mubr.bf16.gmra.mrb[0].mxu0 %v1350
        %v1452 = vpop.f32.mrb[0].mxu0
        %v1453 = vadd.f32 0.0, %v1452
        %v1454 = vpop.f32.mrb[0].mxu0
        %v1455 = vpop.f32.mrb[0].mxu0
        %v1456 = vadd.f32 0.0, %v1455
        %v1457 = vpop.f32.mrb[0].mxu0
        %1458 = vmatprep.mubr.bf16.mxu0 %v1353
        %1459 = vmatmul.mubr.bf16.gmra.mrb[0].mxu0 %v1352
        %v1460 = vpop.f32.mrb[0].mxu0
        %v1461 = vadd.f32 0.0, %v1460
        %v1462 = vpop.f32.mrb[0].mxu0
        %v1463 = vpop.f32.mrb[0].mxu0
        %v1464 = vadd.f32 0.0, %v1463
        %v1465 = vpop.f32.mrb[0].mxu0
        %1466 = vdwg.mxu0
        %v1467 = vmul.f32 %v1405, %v280
        %v1468 = vmul.f32 %v1408, %v281
        %v1469 = vmul.f32 %v1413, %v282
        %v1470 = vmul.f32 %v1416, %v283
        %v1471 = vmul.f32 %v1421, %v284
        %v1472 = vmul.f32 %v1424, %v285
        %v1473 = vmul.f32 %v1429, %v286
        %v1474 = vmul.f32 %v1432, %v287
        %v1475 = vmul.f32 %v1437, %v288
        %v1476 = vmul.f32 %v1440, %v289
        %v1477 = vmul.f32 %v1445, %v290
        %v1478 = vmul.f32 %v1448, %v291
        %v1479 = vmul.f32 %v1453, %v292
        %v1480 = vmul.f32 %v1456, %v293
        %v1481 = vmul.f32 %v1461, %v294
        %v1482 = vmul.f32 %v1464, %v295
        %v1483 = vpack.c.bf16 %v1468, %v1467
        %v1484 = vpack.c.bf16 %v1470, %v1469
        %v1485 = vpack.c.bf16 %v1472, %v1471
        %v1486 = vpack.c.bf16 %v1474, %v1473
        %v1487 = vpack.c.bf16 %v1476, %v1475
        %v1488 = vpack.c.bf16 %v1478, %v1477
        %v1489 = vpack.c.bf16 %v1480, %v1479
        %v1490 = vpack.c.bf16 %v1482, %v1481
        %v1491 = vld [vmem:[#allocation2] sm:$0xff]
        %v1492 = vld [vmem:[#allocation2 + $0x8] sm:$0xff]
        %v1493 = vld [vmem:[#allocation2 + $0x10] sm:$0xff]
        %v1494 = vld [vmem:[#allocation2 + $0x18] sm:$0xff]
        %v1495 = vld [vmem:[#allocation2 + $0x20] sm:$0xff]
        %v1496 = vld [vmem:[#allocation2 + $0x28] sm:$0xff]
        %v1497 = vld [vmem:[#allocation2 + $0x30] sm:$0xff]
        %v1498 = vld [vmem:[#allocation2 + $0x38] sm:$0xff]
        %v1499 = vld [vmem:[#allocation2 + $0x40] sm:$0xff]
        %v1500 = vld [vmem:[#allocation2 + $0x48] sm:$0xff]
        %v1501 = vld [vmem:[#allocation2 + $0x50] sm:$0xff]
        %v1502 = vld [vmem:[#allocation2 + $0x58] sm:$0xff]
        %v1503 = vld [vmem:[#allocation2 + $0x60] sm:$0xff]
        %v1504 = vld [vmem:[#allocation2 + $0x68] sm:$0xff]
        %v1505 = vld [vmem:[#allocation2 + $0x70] sm:$0xff]
        %v1506 = vld [vmem:[#allocation2 + $0x78] sm:$0xff]
        %1507 = vmatprep.subr.bf16.mxu0 %v1492
        %1508 = vmatpush1.bf16.msra.mxu0 %v1491
        %1509 = vmatprep.subr.bf16.mxu0 %v1494
        %1510 = vmatpush1.bf16.msra.mxu0 %v1493
        %1511 = vmatprep.subr.bf16.mxu0 %v1496
        %1512 = vmatpush1.bf16.msra.mxu0 %v1495
        %1513 = vmatprep.subr.bf16.mxu0 %v1498
        %1514 = vmatpush1.bf16.msra.mxu0 %v1497
        %1515 = vmatprep.subr.bf16.mxu0 %v1500
        %1516 = vmatpush1.bf16.msra.mxu0 %v1499
        %1517 = vmatprep.subr.bf16.mxu0 %v1502
        %1518 = vmatpush1.bf16.msra.mxu0 %v1501
        %1519 = vmatprep.subr.bf16.mxu0 %v1504
        %1520 = vmatpush1.bf16.msra.mxu0 %v1503
        %1521 = vmatprep.subr.bf16.mxu0 %v1506
        %1522 = vmatpush1.bf16.msra.mxu0 %v1505
        %1523 = vmatprep.subr.bf16.mxu0 0
        %1524 = vmatpush1.bf16.msra.mxu0 0
        %1525 = vmatprep.subr.bf16.mxu0 0
        %1526 = vmatpush1.bf16.msra.mxu0 0
        %1527 = vmatprep.subr.bf16.mxu0 0
        %1528 = vmatpush1.bf16.msra.mxu0 0
        %1529 = vmatprep.subr.bf16.mxu0 0
        %1530 = vmatpush1.bf16.msra.mxu0 0
        %1531 = vmatprep.subr.bf16.mxu0 0
        %1532 = vmatpush1.bf16.msra.mxu0 0
        %1533 = vmatprep.subr.bf16.mxu0 0
        %1534 = vmatpush1.bf16.msra.mxu0 0
        %1535 = vmatprep.subr.bf16.mxu0 0
        %1536 = vmatpush1.bf16.msra.mxu0 0
        %1537 = vmatprep.subr.bf16.mxu0 0
        %1538 = vmatpush1.bf16.msra.mxu0 0
        %1539 = vmatprep.mubr.bf16.mxu0 0
        %1540 = vmatmul.mubr.bf16.gmra.mrb[0].mxu0 %v1483
        %v1541 = vpop.f32.mrb[0].mxu0
        %v1542 = vadd.f32 0.0, %v1541
        %v1543 = vpop.f32.mrb[0].mxu0
        %v1544 = vadd.f32 0.0, %v1543
        %v1545 = vpop.f32.mrb[0].mxu0
        %v1546 = vadd.f32 0.0, %v1545
        %v1547 = vpop.f32.mrb[0].mxu0
        %v1548 = vadd.f32 0.0, %v1547
        %1549 = vmatprep.mubr.bf16.mxu0 0
        %1550 = vmatmul.mubr.bf16.gmra.mrb[0].mxu0 %v1484
        %v1551 = vpop.f32.mrb[0].mxu0
        %v1552 = vadd.f32 0.0, %v1551
        %v1553 = vpop.f32.mrb[0].mxu0
        %v1554 = vadd.f32 0.0, %v1553
        %v1555 = vpop.f32.mrb[0].mxu0
        %v1556 = vadd.f32 0.0, %v1555
        %v1557 = vpop.f32.mrb[0].mxu0
        %v1558 = vadd.f32 0.0, %v1557
        %1559 = vmatprep.mubr.bf16.mxu0 0
        %1560 = vmatmul.mubr.bf16.gmra.mrb[0].mxu0 %v1485
        %v1561 = vpop.f32.mrb[0].mxu0
        %v1562 = vadd.f32 0.0, %v1561
        %v1563 = vpop.f32.mrb[0].mxu0
        %v1564 = vadd.f32 0.0, %v1563
        %v1565 = vpop.f32.mrb[0].mxu0
        %v1566 = vadd.f32 0.0, %v1565
        %v1567 = vpop.f32.mrb[0].mxu0
        %v1568 = vadd.f32 0.0, %v1567
        %1569 = vmatprep.mubr.bf16.mxu0 0
        %1570 = vmatmul.mubr.bf16.gmra.mrb[0].mxu0 %v1486
        %v1571 = vpop.f32.mrb[0].mxu0
        %v1572 = vadd.f32 0.0, %v1571
        %v1573 = vpop.f32.mrb[0].mxu0
        %v1574 = vadd.f32 0.0, %v1573
        %v1575 = vpop.f32.mrb[0].mxu0
        %v1576 = vadd.f32 0.0, %v1575
        %v1577 = vpop.f32.mrb[0].mxu0
        %v1578 = vadd.f32 0.0, %v1577
        %1579 = vmatprep.mubr.bf16.mxu0 0
        %1580 = vmatmul.mubr.bf16.gmra.mrb[0].mxu0 %v1487
        %v1581 = vpop.f32.mrb[0].mxu0
        %v1582 = vadd.f32 0.0, %v1581
        %v1583 = vpop.f32.mrb[0].mxu0
        %v1584 = vadd.f32 0.0, %v1583
        %v1585 = vpop.f32.mrb[0].mxu0
        %v1586 = vadd.f32 0.0, %v1585
        %v1587 = vpop.f32.mrb[0].mxu0
        %v1588 = vadd.f32 0.0, %v1587
        %1589 = vmatprep.mubr.bf16.mxu0 0
        %1590 = vmatmul.mubr.bf16.gmra.mrb[0].mxu0 %v1488
        %v1591 = vpop.f32.mrb[0].mxu0
        %v1592 = vadd.f32 0.0, %v1591
        %v1593 = vpop.f32.mrb[0].mxu0
        %v1594 = vadd.f32 0.0, %v1593
        %v1595 = vpop.f32.mrb[0].mxu0
        %v1596 = vadd.f32 0.0, %v1595
        %v1597 = vpop.f32.mrb[0].mxu0
        %v1598 = vadd.f32 0.0, %v1597
        %1599 = vmatprep.mubr.bf16.mxu0 0
        %1600 = vmatmul.mubr.bf16.gmra.mrb[0].mxu0 %v1489
        %v1601 = vpop.f32.mrb[0].mxu0
        %v1602 = vadd.f32 0.0, %v1601
        %v1603 = vpop.f32.mrb[0].mxu0
        %v1604 = vadd.f32 0.0, %v1603
        %v1605 = vpop.f32.mrb[0].mxu0
        %v1606 = vadd.f32 0.0, %v1605
        %v1607 = vpop.f32.mrb[0].mxu0
        %v1608 = vadd.f32 0.0, %v1607
        %1609 = vmatprep.mubr.bf16.mxu0 0
        %1610 = vmatmul.mubr.bf16.gmra.mrb[0].mxu0 %v1490
        %v1611 = vpop.f32.mrb[0].mxu0
        %v1612 = vadd.f32 0.0, %v1611
        %v1613 = vpop.f32.mrb[0].mxu0
        %v1614 = vadd.f32 0.0, %v1613
        %v1615 = vpop.f32.mrb[0].mxu0
        %v1616 = vadd.f32 0.0, %v1615
        %v1617 = vpop.f32.mrb[0].mxu0
        %v1618 = vadd.f32 0.0, %v1617
        %1619 = vdwg.mxu0
        %v1620 = vpack.c.bf16 %v1546, %v1542
        %v1621 = vpack.c.bf16 %v1548, %v1544
        %v1622 = vpack.c.bf16 %v1556, %v1552
        %v1623 = vpack.c.bf16 %v1558, %v1554
        %v1624 = vpack.c.bf16 %v1566, %v1562
        %v1625 = vpack.c.bf16 %v1568, %v1564
        %v1626 = vpack.c.bf16 %v1576, %v1572
        %v1627 = vpack.c.bf16 %v1578, %v1574
        %v1628 = vpack.c.bf16 %v1586, %v1582
        %v1629 = vpack.c.bf16 %v1588, %v1584
        %v1630 = vpack.c.bf16 %v1596, %v1592
        %v1631 = vpack.c.bf16 %v1598, %v1594
        %v1632 = vpack.c.bf16 %v1606, %v1602
        %v1633 = vpack.c.bf16 %v1608, %v1604
        %v1634 = vpack.c.bf16 %v1616, %v1612
        %v1635 = vpack.c.bf16 %v1618, %v1614
        %1637 = vset.pattern.permute.xlu0 0
        %1638 = vperm.xlu0 %1637, %v276
        %v1639 = vpop.permute.xlu0 %1638
        %1642 = vset.pattern.permute.xlu0 0
        %1643 = vperm.xlu0 %1642, %v277
        %v1644 = vpop.permute.xlu0 %1643
        %1647 = vset.pattern.permute.xlu0 0
        %1648 = vperm.xlu0 %1647, %v278
        %v1649 = vpop.permute.xlu0 %1648
        %1652 = vset.pattern.permute.xlu0 0
        %1653 = vperm.xlu0 %1652, %v279
        %v1654 = vpop.permute.xlu0 %1653
        %v1660 = vunpack.c.l.b16 %v272
        %v1661 = vunpack.c.l.b16 %v273
        %v1662 = vunpack.c.l.b16 %v274
        %v1663 = vunpack.c.l.b16 %v275
        %v1664 = vpack.c.b16 %v1661, %v1660
        %v1665 = vpack.c.b16 %v1663, %v1662
        %1668 = vmatprep.subr.bf16.mxu0 %v1621
        %1669 = vmatpush1.bf16.msra.mxu0 %v1620
        %1670 = vmatprep.subr.bf16.mxu0 %v1623
        %1671 = vmatpush1.bf16.msra.mxu0 %v1622
        %1672 = vmatprep.subr.bf16.mxu0 %v1625
        %1673 = vmatpush1.bf16.msra.mxu0 %v1624
        %1674 = vmatprep.subr.bf16.mxu0 %v1627
        %1675 = vmatpush1.bf16.msra.mxu0 %v1626
        %1676 = vmatprep.subr.bf16.mxu0 %v1629
        %1677 = vmatpush1.bf16.msra.mxu0 %v1628
        %1678 = vmatprep.subr.bf16.mxu0 %v1631
        %1679 = vmatpush1.bf16.msra.mxu0 %v1630
        %1680 = vmatprep.subr.bf16.mxu0 %v1633
        %1681 = vmatpush1.bf16.msra.mxu0 %v1632
        %1682 = vmatprep.subr.bf16.mxu0 %v1635
        %1683 = vmatpush1.bf16.msra.mxu0 %v1634
        %1684 = vmatprep.subr.bf16.mxu0 0
        %1685 = vmatpush1.bf16.msra.mxu0 0
        %1686 = vmatprep.subr.bf16.mxu0 0
        %1687 = vmatpush1.bf16.msra.mxu0 0
        %1688 = vmatprep.subr.bf16.mxu0 0
        %1689 = vmatpush1.bf16.msra.mxu0 0
        %1690 = vmatprep.subr.bf16.mxu0 0
        %1691 = vmatpush1.bf16.msra.mxu0 0
        %1692 = vmatprep.subr.bf16.mxu0 0
        %1693 = vmatpush1.bf16.msra.mxu0 0
        %1694 = vmatprep.subr.bf16.mxu0 0
        %1695 = vmatpush1.bf16.msra.mxu0 0
        %1696 = vmatprep.subr.bf16.mxu0 0
        %1697 = vmatpush1.bf16.msra.mxu0 0
        %1698 = vmatprep.subr.bf16.mxu0 0
        %1699 = vmatpush1.bf16.msra.mxu0 0
        %1700 = vmatprep.mubr.bf16.mxu0 0
        %1701 = vmatmul.mubr.bf16.gmra.mrb[0].mxu0 %v1664
        %v1702 = vpop.f32.mrb[0].mxu0
        %v1703 = vadd.f32 %v1639, %v1702
        %v1704 = vpop.f32.mrb[0].mxu0
        %v1705 = vadd.f32 %v1639, %v1704
        %v1706 = vpop.f32.mrb[0].mxu0
        %v1707 = vadd.f32 %v1644, %v1706
        %v1708 = vpop.f32.mrb[0].mxu0
        %v1709 = vadd.f32 %v1644, %v1708
        %1710 = vmatprep.mubr.bf16.mxu0 0
        %1711 = vmatmul.mubr.bf16.gmra.mrb[0].mxu0 %v1665
        %v1712 = vpop.f32.mrb[0].mxu0
        %v1713 = vadd.f32 %v1649, %v1712
        %v1714 = vpop.f32.mrb[0].mxu0
        %v1715 = vadd.f32 %v1649, %v1714
        %v1716 = vpop.f32.mrb[0].mxu0
        %v1717 = vadd.f32 %v1654, %v1716
        %v1718 = vpop.f32.mrb[0].mxu0
        %v1719 = vadd.f32 %v1654, %v1718
        %1720 = vdwg.mxu0
        %v1721 = vadd.f32 %v1703, %v1705
        %v1722 = vadd.f32 %v1721, %v1707
        %v1723 = vadd.f32 %v1722, %v1709
        %v1724 = vadd.f32 %v1723, %v1713
        %v1725 = vadd.f32 %v1724, %v1715
        %v1726 = vadd.f32 %v1725, %v1717
        %v1727 = vadd.f32 %v1726, %v1719
        %1728 = vadd.xlane.f32.xlu0 %v1727
        %v1729 = vpop.xlane.xlu0 %1728
        %v1730 = vrot.slane %v1729, 4
        %v1731 = vadd.f32 %v1729, %v1730
        %v1732 = vrot.slane %v1731, 2
        %v1733 = vadd.f32 %v1731, %v1732
        %v1734 = vrot.slane %v1733, 1
        %v1735 = vadd.f32 %v1733, %v1734
        %s1736 = vtos %v1735
        %v1737 = vstv %s1736
        %v1738 = vmul.f32 %v1703, %v1703
        %v1739 = vmul.f32 %v1705, %v1705
        %v1740 = vmul.f32 %v1707, %v1707
        %v1741 = vmul.f32 %v1709, %v1709
        %v1742 = vmul.f32 %v1713, %v1713
        %v1743 = vmul.f32 %v1715, %v1715
        %v1744 = vmul.f32 %v1717, %v1717
        %v1745 = vmul.f32 %v1719, %v1719
        %v1746 = vadd.f32 %v1738, %v1739
        %v1747 = vadd.f32 %v1746, %v1740
        %v1748 = vadd.f32 %v1747, %v1741
        %v1749 = vadd.f32 %v1748, %v1742
        %v1750 = vadd.f32 %v1749, %v1743
        %v1751 = vadd.f32 %v1750, %v1744
        %v1752 = vadd.f32 %v1751, %v1745
        %1753 = vadd.xlane.f32.xlu0 %v1752
        %v1754 = vpop.xlane.xlu0 %1753
        %v1755 = vrot.slane %v1754, 4
        %v1756 = vadd.f32 %v1754, %v1755
        %v1757 = vrot.slane %v1756, 2
        %v1758 = vadd.f32 %v1756, %v1757
        %v1759 = vrot.slane %v1758, 1
        %v1760 = vadd.f32 %v1758, %v1759
        %s1761 = vtos %v1760
        %v1762 = vstv %s1761
        %v1763 = vmul.f32 %v1737, 0.00012207031
        %v1764 = vmul.f32 %v1762, 0.00012207031
        %v1765 = vmul.f32 %v1763, %v1763
        %v1766 = vsub.f32 %v1764, %v1765
        %v1767 = vsub.f32 %v1703, %v1763
        %v1768 = vsub.f32 %v1705, %v1763
        %v1769 = vsub.f32 %v1707, %v1763
        %v1770 = vsub.f32 %v1709, %v1763
        %v1771 = vsub.f32 %v1713, %v1763
        %v1772 = vsub.f32 %v1715, %v1763
        %v1773 = vsub.f32 %v1717, %v1763
        %v1774 = vsub.f32 %v1719, %v1763
        %v1775 = vadd.f32 %v1766, 1e-05
        %v1776 = vrsqrt.pop %v1775
        %v1777 = vmul.f32 %v1767, %v1776
        %v1778 = vmul.f32 %v1768, %v1776
        %v1779 = vmul.f32 %v1769, %v1776
        %v1780 = vmul.f32 %v1770, %v1776
        %v1781 = vmul.f32 %v1771, %v1776
        %v1782 = vmul.f32 %v1772, %v1776
        %v1783 = vmul.f32 %v1773, %v1776
        %v1784 = vmul.f32 %v1774, %v1776
        %1785 = vset.pattern.permute.xlu0 1
        %1786 = vperm.xlu0 %1785, %v276
        %v1787 = vpop.permute.xlu0 %1786
        %1789 = vset.pattern.permute.xlu0 1
        %1790 = vperm.xlu0 %1789, %v277
        %v1791 = vpop.permute.xlu0 %1790
        %1793 = vset.pattern.permute.xlu0 1
        %1794 = vperm.xlu0 %1793, %v278
        %v1795 = vpop.permute.xlu0 %1794
        %1797 = vset.pattern.permute.xlu0 1
        %1798 = vperm.xlu0 %1797, %v279
        %v1799 = vpop.permute.xlu0 %1798
        %v1801 = vmul.f32 %v1787, %v1777
        %v1802 = vmul.f32 %v1787, %v1778
        %v1803 = vmul.f32 %v1791, %v1779
        %v1804 = vmul.f32 %v1791, %v1780
        %v1805 = vmul.f32 %v1795, %v1781
        %v1806 = vmul.f32 %v1795, %v1782
        %v1807 = vmul.f32 %v1799, %v1783
        %v1808 = vmul.f32 %v1799, %v1784
        %1809 = vset.pattern.permute.xlu0 2
        %1810 = vperm.xlu0 %1809, %v276
        %v1811 = vpop.permute.xlu0 %1810
        %1813 = vset.pattern.permute.xlu0 2
        %1814 = vperm.xlu0 %1813, %v277
        %v1815 = vpop.permute.xlu0 %1814
        %1817 = vset.pattern.permute.xlu0 2
        %1818 = vperm.xlu0 %1817, %v278
        %v1819 = vpop.permute.xlu0 %1818
        %1821 = vset.pattern.permute.xlu0 2
        %1822 = vperm.xlu0 %1821, %v279
        %v1823 = vpop.permute.xlu0 %1822
        %v1825 = vadd.f32 %v1801, %v1811
        %v1826 = vadd.f32 %v1802, %v1811
        %v1827 = vadd.f32 %v1803, %v1815
        %v1828 = vadd.f32 %v1804, %v1815
        %v1829 = vadd.f32 %v1805, %v1819
        %v1830 = vadd.f32 %v1806, %v1819
        %v1831 = vadd.f32 %v1807, %v1823
        %v1832 = vadd.f32 %v1808, %v1823
        %1833 = vst [vmem:[%s217] sm:$0xff] %v1825
        %1834 = vst [vmem:[%s217 + $0x8] sm:$0xff] %v1826
        %1835 = vst [vmem:[%s217 + $0x10] sm:$0xff] %v1827
        %1836 = vst [vmem:[%s217 + $0x18] sm:$0xff] %v1828
        %1837 = vst [vmem:[%s217 + $0x20] sm:$0xff] %v1829
        %1838 = vst [vmem:[%s217 + $0x28] sm:$0xff] %v1830
        %1839 = vst [vmem:[%s217 + $0x30] sm:$0xff] %v1831
        %1840 = vst [vmem:[%s217 + $0x38] sm:$0xff] %v1832
        %s1841 = sand.u32 %s137, 1
        %s1842 = scalar_lea.sflag [#allocation4], %s1841
        %s1843 = sand.u32 %s137, 1
        %s1844 = smul.addr %s1843, 64
        %s1845 = scalar_lea.vmem [#allocation3], %s1844
        // Predicated region
        $region41: #{tpu_custom_call.1} parent=39 // pred_check
          %p1846 = pneg %p147
        $region42: #{tpu_custom_call.1} parent=39 // pred_check_branch
          %1848 = sbr.rel (%p1846) target = $region44
        $region43: #{tpu_custom_call.1} parent=39 // pred_region
          %s1850 = ssub.s32 1024, 1024
          %1851 = vsyncadd %s1842, %s1850
          %s1852 = smul.addr %s19, 8
          %s1853 = smul.addr %s1852, 128
          %s1854 = scalar_lea.hbm %s5, %s1853
          %s1855 = sshll.u32 %s1845, 4
          %s1856 = int_to_ptr.vmem [resolvable:$true] %s1855
          %1861 = dma.vmem_to_hbm [thread:$0]  %s1856, 1024, %s1854, %s1842, 256, 256, 16
        $region44: #{tpu_custom_call.1} parent=39 // pred_fallthru
          _
      $region40: #{tpu_custom_call.1} parent=5 // pred_fallthru
        _
      %p1862 = scmp.le.s32.totalorder 2, %s14
      // Predicated region
      $region45: #{tpu_custom_call.1} parent=5 // pred_check
        %p1863 = pneg %p1862
      $region46: #{tpu_custom_call.1} parent=5 // pred_check_branch
        %1865 = sbr.rel (%p1863) target = $region48
      $region47: #{tpu_custom_call.1} parent=5 // pred_region
        %s1866 = ssub.s32 %s14, 2
        // Predicated region
        $region49: #{tpu_custom_call.1} parent=47 // pred_check
          %p1867 = pneg %p153
        $region50: #{tpu_custom_call.1} parent=47 // pred_check_branch
          %1869 = sbr.rel (%p1867) target = $region52
        $region51: #{tpu_custom_call.1} parent=47 // pred_region
          %s1870 = sand.u32 %s138, 1
          %s1871 = scalar_lea.sflag [#allocation4], %s1870
          %s1872 = sand.u32 %s138, 1
          %s1873 = smul.addr %s1872, 64
          %s1874 = scalar_lea.vmem [#allocation3], %s1873
          %1875 = dma.done %s1871, 1024
        $region52: #{tpu_custom_call.1} parent=47 // pred_fallthru
          _
      $region48: #{tpu_custom_call.1} parent=5 // pred_fallthru
        _
    $region6: #{tpu_custom_call.1} parent=1 // loop_footer
      %s18 = sadd.s32 1, %s14
    $region7: #{tpu_custom_call.1} parent=1 // loop_footer_branch
      %13 = sbr.rel target = $region3
    $region8: #{tpu_custom_call.1} parent=1 // loop_exit
      _
    %1876 = vsyncpa [#allocation4], 1
    %s1877 = scalar_lea.sflag [#allocation4], 1
    %1878 = vsyncpa %s1877, 1

</llo_original>
